<compile_context>
chip_gen: v7x
topology: tpu7x:2x2x1
jax: 0.10.0
libtpu: 0.0.40
codegen_flags: <defaults>
</compile_context>

<pallas_src>
import functools

import jax
import jax.numpy as jnp
import numpy as np
from jax.experimental import pallas as pl
from jax.experimental.pallas import tpu as pltpu

EPS = 1e-5  # nn.BatchNorm2d default eps


def _resblock_kernel(inv_n,
                     x_ref, w1_ref, w2_ref, sup_ref, sdn_ref,
                     s1_ref, s1t_ref, s2_ref, s2t_ref,
                     g1_ref, be1_ref, g2_ref, be2_ref,
                     o_ref):
    """Everything operates on the lane-dense (N*H, W*C) layout.

    x_ref   : (R, W*Cin)          flattened input, R = N*H
    w*_ref  : (3, W*Ci, W*Co)     banded conv matrices, one per dy tap
    sup/sdn : (R, R)              row-shift (dy = -1 / +1) matrices with the
                                  H-boundary / batch-boundary zeroing baked in
    s*_ref  : (W*C, C)            0/1 lane->channel reduction matrix
    s*t_ref : (C, W*C)            its transpose (channel -> lane broadcast)
    g*/be*  : (1, C)              BatchNorm gamma / beta
    o_ref   : (R, W*Cout)
    """
    f32 = jnp.float32
    x = x_ref[...]
    sup = sup_ref[...]
    sdn = sdn_ref[...]

    def conv3x3(a, w_ref):
        # dy = -1 / +1 rows (zero-padded at image top/bottom, batch-isolated).
        up = jnp.dot(sup, a, preferred_element_type=f32)
        dn = jnp.dot(sdn, a, preferred_element_type=f32)
        # One MXU matmul per dy tap; dx taps + channel mixing are inside w_ref.
        y = jnp.dot(up, w_ref[0], preferred_element_type=f32)
        y = y + jnp.dot(a, w_ref[1], preferred_element_type=f32)
        y = y + jnp.dot(dn, w_ref[2], preferred_element_type=f32)
        return y

    def bn_relu(y, sel, sel_t, gamma, beta):
        # Single stats pass: per-lane sums, then fold lanes of the same channel
        # together with the 0/1 selection matmul.  var = E[y^2] - E[y]^2.
        srow = jnp.sum(y, axis=0, keepdims=True)          # (1, W*C)
        qrow = jnp.sum(y * y, axis=0, keepdims=True)      # (1, W*C)
        mu = jnp.dot(srow, sel, preferred_element_type=f32) * inv_n    # (1, C)
        ex2 = jnp.dot(qrow, sel, preferred_element_type=f32) * inv_n   # (1, C)
        var = ex2 - mu * mu                                # biased (training BN)
        scale_c = gamma * jax.lax.rsqrt(var + EPS)         # (1, C)
        shift_c = beta - mu * scale_c                      # (1, C)
        # Broadcast per-channel scale/shift back to the (W*C) lane layout.
        scale = jnp.dot(scale_c, sel_t, preferred_element_type=f32)    # (1, W*C)
        shift = jnp.dot(shift_c, sel_t, preferred_element_type=f32)    # (1, W*C)
        # Single fused normalize + affine + relu pass.
        return jnp.maximum(y * scale + shift, 0.0)

    h1 = bn_relu(conv3x3(x, w1_ref), s1_ref[...], s1t_ref[...],
                 g1_ref[...], be1_ref[...])
    h2 = bn_relu(conv3x3(h1, w2_ref), s2_ref[...], s2t_ref[...],
                 g2_ref[...], be2_ref[...])

    o_ref[...] = x + h2                                    # residual add


def resblock_forward(x_nchw, params):
    """ResBlock forward. x_nchw: (N, C_in, H, W) float32 (PyTorch layout)."""
    x = jnp.transpose(x_nchw, (0, 2, 3, 1)).astype(jnp.float32)   # -> NHWC
    N, H, W, c_in = x.shape
    w1 = params["w1"].astype(jnp.float32)   # HWIO (3, 3, c_in,  c_hid)
    w2 = params["w2"].astype(jnp.float32)   # HWIO (3, 3, c_hid, c_out)
    c_hid, c_out = w1.shape[-1], w2.shape[-1]
    assert c_out == c_in, "residual add requires out_size == in_size"

    R = N * H
    x2 = x.reshape(R, W * c_in)             # lane index = w * C + c

    def conv_mats(w_hwio):
        # Banded block matrix per dy: element [(w+dx-1)*ci + a, w*co + b]
        # equals w[dy, dx, a, b]; out-of-range width taps drop out (= zero pad).
        kh, kw, ci, co = w_hwio.shape
        mats = []
        for dy in range(kh):
            m = jnp.zeros((W * ci, W * co), jnp.float32)
            for dx in range(kw):
                m = m + jnp.kron(jnp.eye(W, k=1 - dx, dtype=jnp.float32),
                                 w_hwio[dy, dx])
            mats.append(m)
        return jnp.stack(mats)               # (3, W*ci, W*co)

    w1_big = conv_mats(w1)                   # (3, W*c_in,  W*c_hid)
    w2_big = conv_mats(w2)                   # (3, W*c_hid, W*c_out)

    # Row-shift matrices: (Sup @ X)[n*H + h] = X[n*H + h - 1] for h > 0, else 0.
    # Zeroing rows at h == 0 / h == H-1 handles both the conv zero padding and
    # the batch boundary in one constant matrix.
    ridx = jnp.arange(R)
    sup = jnp.eye(R, k=-1, dtype=jnp.float32) * (ridx % H != 0)[:, None]
    sdn = jnp.eye(R, k=1, dtype=jnp.float32) * (ridx % H != H - 1)[:, None]

    # Lane -> channel selection matrices (0/1): S[w*C + c, c'] = (c == c').
    s1 = jnp.tile(jnp.eye(c_hid, dtype=jnp.float32), (W, 1))   # (W*c_hid, c_hid)
    s2 = jnp.tile(jnp.eye(c_out, dtype=jnp.float32), (W, 1))   # (W*c_out, c_out)

    row = lambda v: v.reshape(1, -1).astype(jnp.float32)
    # NOTE: conv biases b1/b2 are intentionally NOT passed — training-mode
    # BatchNorm subtracts the batch mean, which cancels them exactly.
    args = (x2, w1_big, w2_big, sup, sdn,
            s1, s1.T, s2, s2.T,
            row(params["g1"]), row(params["beta1"]),
            row(params["g2"]), row(params["beta2"]))

    vmem = pl.BlockSpec(memory_space=pltpu.MemorySpace.VMEM)
    inv_n = 1.0 / float(N * H * W)           # elements per channel for BN stats

    out2 = pl.pallas_call(
        functools.partial(_resblock_kernel, inv_n),
        out_shape=jax.ShapeDtypeStruct((R, W * c_out), jnp.float32),
        in_specs=[vmem] * len(args),
        out_specs=vmem,
        compiler_params=pltpu.CompilerParams(vmem_limit_bytes=32 * 1024 * 1024),
    )(*args)

    return jnp.transpose(out2.reshape(N, H, W, c_out), (0, 3, 1, 2))   # -> NCHW


def resblock_reference(x_nchw, params):
    """Pure-JAX reference (full f32 precision, includes the conv biases)."""
    x = jnp.transpose(x_nchw, (0, 2, 3, 1)).astype(jnp.float32)

    def conv(y, w, b):
        out = jax.lax.conv_general_dilated(
            y, w, window_strides=(1, 1), padding="SAME",
            dimension_numbers=("NHWC", "HWIO", "NHWC"),
            precision=jax.lax.Precision.HIGHEST)
        return out + b.reshape(1, 1, 1, -1)

    def bn_relu(y, g, be):
        mu = jnp.mean(y, axis=(0, 1, 2), keepdims=True)
        var = jnp.mean((y - mu) ** 2, axis=(0, 1, 2), keepdims=True)
        y = (y - mu) * jax.lax.rsqrt(var + EPS)
        y = y * g.reshape(1, 1, 1, -1) + be.reshape(1, 1, 1, -1)
        return jax.nn.relu(y)

    h = bn_relu(conv(x, params["w1"], params["b1"]), params["g1"], params["beta1"])
    h = bn_relu(conv(h, params["w2"], params["b2"]), params["g2"], params["beta2"])
    return jnp.transpose(x + h, (0, 3, 1, 2))


if __name__ == "__main__":
    key = jax.random.PRNGKey(0)
    in_size, hidden_size, out_size = 4, 8, 4          # out_size == in_size (residual)
    N, H, W = 2, 16, 16
    ks = jax.random.split(key, 9)

    # PyTorch Conv2d weight layout is (out, in, kH, kW); convert to HWIO.
    w1_oihw = 0.1 * jax.random.normal(ks[0], (hidden_size, in_size, 3, 3), jnp.float32)
    w2_oihw = 0.1 * jax.random.normal(ks[1], (out_size, hidden_size, 3, 3), jnp.float32)
    params = dict(
        w1=jnp.transpose(w1_oihw, (2, 3, 1, 0)),       # (3,3,in,hidden)
        b1=0.1 * jax.random.normal(ks[2], (hidden_size,), jnp.float32),
        g1=1.0 + 0.1 * jax.random.normal(ks[3], (hidden_size,), jnp.float32),
        beta1=0.1 * jax.random.normal(ks[4], (hidden_size,), jnp.float32),
        w2=jnp.transpose(w2_oihw, (2, 3, 1, 0)),       # (3,3,hidden,out)
        b2=0.1 * jax.random.normal(ks[5], (out_size,), jnp.float32),
        g2=1.0 + 0.1 * jax.random.normal(ks[6], (out_size,), jnp.float32),
        beta2=0.1 * jax.random.normal(ks[7], (out_size,), jnp.float32),
    )
    x = jax.random.normal(ks[8], (N, in_size, H, W), jnp.float32)   # NCHW like PyTorch

    fwd = jax.jit(resblock_forward)
    out = jax.block_until_ready(fwd(x, params))
    ref = jax.block_until_ready(resblock_reference(x, params))
    np.testing.assert_allclose(np.asarray(out), np.asarray(ref), rtol=5e-4, atol=5e-4)
    print("KERNEL_OK")
</pallas_src>

<mosaic_0001>
module attributes {stable_mosaic.version = 11 : i64} {
  func.func @_resblock_kernel(%arg0: memref<32x64xf32, #tpu.memory_space<vmem>>, %arg1: memref<3x64x128xf32, #tpu.memory_space<vmem>>, %arg2: memref<3x128x64xf32, #tpu.memory_space<vmem>>, %arg3: memref<32x32xf32, #tpu.memory_space<vmem>>, %arg4: memref<32x32xf32, #tpu.memory_space<vmem>>, %arg5: memref<128x8xf32, #tpu.memory_space<vmem>>, %arg6: memref<8x128xf32, #tpu.memory_space<vmem>>, %arg7: memref<64x4xf32, #tpu.memory_space<vmem>>, %arg8: memref<4x64xf32, #tpu.memory_space<vmem>>, %arg9: memref<1x8xf32, #tpu.memory_space<vmem>>, %arg10: memref<1x8xf32, #tpu.memory_space<vmem>>, %arg11: memref<1x4xf32, #tpu.memory_space<vmem>>, %arg12: memref<1x4xf32, #tpu.memory_space<vmem>>, %arg13: memref<32x64xf32, #tpu.memory_space<vmem>>) attributes {dimension_semantics = [], scalar_prefetch = 0 : i64, scratch_operands = 0 : i64, tpu.core_type = #tpu.core_type<tc>} {
    %c0 = arith.constant 0 : index
    %c0_0 = arith.constant 0 : index
    %0 = vector.load %arg0[%c0, %c0_0] : memref<32x64xf32, #tpu.memory_space<vmem>>, vector<32x64xf32>
    %c0_1 = arith.constant 0 : index
    %c0_2 = arith.constant 0 : index
    %1 = vector.load %arg3[%c0_1, %c0_2] : memref<32x32xf32, #tpu.memory_space<vmem>>, vector<32x32xf32>
    %c0_3 = arith.constant 0 : index
    %c0_4 = arith.constant 0 : index
    %2 = vector.load %arg4[%c0_3, %c0_4] : memref<32x32xf32, #tpu.memory_space<vmem>>, vector<32x32xf32>
    %cst = arith.constant dense<0.000000e+00> : vector<32x64xf32>
    %3 = tpu.matmul %1, %0, %cst {dimension_numbers = #tpu.dot_dimension_numbers<[1], [0], [0], [1], [0, 0, 1, 1], [], []>} : vector<32x32xf32>, vector<32x64xf32>, vector<32x64xf32> -> vector<32x64xf32>
    %cst_5 = arith.constant dense<0.000000e+00> : vector<32x64xf32>
    %4 = tpu.matmul %2, %0, %cst_5 {dimension_numbers = #tpu.dot_dimension_numbers<[1], [0], [0], [1], [0, 0, 1, 1], [], []>} : vector<32x32xf32>, vector<32x64xf32>, vector<32x64xf32> -> vector<32x64xf32>
    %c0_6 = arith.constant 0 : index
    %c0_7 = arith.constant 0 : index
    %c0_8 = arith.constant 0 : index
    %5 = vector.load %arg1[%c0_6, %c0_7, %c0_8] : memref<3x64x128xf32, #tpu.memory_space<vmem>>, vector<1x64x128xf32>
    %6 = vector.shape_cast %5 : vector<1x64x128xf32> to vector<64x128xf32>
    %cst_9 = arith.constant dense<0.000000e+00> : vector<32x128xf32>
    %7 = tpu.matmul %3, %6, %cst_9 {dimension_numbers = #tpu.dot_dimension_numbers<[1], [0], [0], [1], [0, 0, 1, 1], [], []>} : vector<32x64xf32>, vector<64x128xf32>, vector<32x128xf32> -> vector<32x128xf32>
    %c1 = arith.constant 1 : index
    %c0_10 = arith.constant 0 : index
    %c0_11 = arith.constant 0 : index
    %8 = vector.load %arg1[%c1, %c0_10, %c0_11] : memref<3x64x128xf32, #tpu.memory_space<vmem>>, vector<1x64x128xf32>
    %9 = vector.shape_cast %8 : vector<1x64x128xf32> to vector<64x128xf32>
    %cst_12 = arith.constant dense<0.000000e+00> : vector<32x128xf32>
    %10 = tpu.matmul %0, %9, %cst_12 {dimension_numbers = #tpu.dot_dimension_numbers<[1], [0], [0], [1], [0, 0, 1, 1], [], []>} : vector<32x64xf32>, vector<64x128xf32>, vector<32x128xf32> -> vector<32x128xf32>
    %11 = arith.addf %7, %10 : vector<32x128xf32>
    %c2 = arith.constant 2 : index
    %c0_13 = arith.constant 0 : index
    %c0_14 = arith.constant 0 : index
    %12 = vector.load %arg1[%c2, %c0_13, %c0_14] : memref<3x64x128xf32, #tpu.memory_space<vmem>>, vector<1x64x128xf32>
    %13 = vector.shape_cast %12 : vector<1x64x128xf32> to vector<64x128xf32>
    %cst_15 = arith.constant dense<0.000000e+00> : vector<32x128xf32>
    %14 = tpu.matmul %4, %13, %cst_15 {dimension_numbers = #tpu.dot_dimension_numbers<[1], [0], [0], [1], [0, 0, 1, 1], [], []>} : vector<32x64xf32>, vector<64x128xf32>, vector<32x128xf32> -> vector<32x128xf32>
    %15 = arith.addf %11, %14 : vector<32x128xf32>
    %c0_16 = arith.constant 0 : index
    %c0_17 = arith.constant 0 : index
    %16 = vector.load %arg5[%c0_16, %c0_17] : memref<128x8xf32, #tpu.memory_space<vmem>>, vector<128x8xf32>
    %c0_18 = arith.constant 0 : index
    %c0_19 = arith.constant 0 : index
    %17 = vector.load %arg6[%c0_18, %c0_19] : memref<8x128xf32, #tpu.memory_space<vmem>>, vector<8x128xf32>
    %c0_20 = arith.constant 0 : index
    %c0_21 = arith.constant 0 : index
    %18 = vector.load %arg9[%c0_20, %c0_21] : memref<1x8xf32, #tpu.memory_space<vmem>>, vector<1x8xf32>
    %c0_22 = arith.constant 0 : index
    %c0_23 = arith.constant 0 : index
    %19 = vector.load %arg10[%c0_22, %c0_23] : memref<1x8xf32, #tpu.memory_space<vmem>>, vector<1x8xf32>
    %cst_24 = arith.constant dense<0.000000e+00> : vector<128xf32>
    %20 = vector.multi_reduction <add>, %15, %cst_24 [0] : vector<32x128xf32> to vector<128xf32>
    %21 = vector.shape_cast %20 : vector<128xf32> to vector<1x128xf32>
    %22 = arith.mulf %15, %15 : vector<32x128xf32>
    %cst_25 = arith.constant dense<0.000000e+00> : vector<128xf32>
    %23 = vector.multi_reduction <add>, %22, %cst_25 [0] : vector<32x128xf32> to vector<128xf32>
    %24 = vector.shape_cast %23 : vector<128xf32> to vector<1x128xf32>
    %cst_26 = arith.constant dense<0.000000e+00> : vector<1x8xf32>
    %25 = tpu.matmul %21, %16, %cst_26 {dimension_numbers = #tpu.dot_dimension_numbers<[1], [0], [0], [1], [0, 0, 1, 1], [], []>} : vector<1x128xf32>, vector<128x8xf32>, vector<1x8xf32> -> vector<1x8xf32>
    %cst_27 = arith.constant 0.001953125 : f32
    %26 = vector.broadcast %cst_27 : f32 to vector<1x8xf32>
    %27 = arith.mulf %25, %26 : vector<1x8xf32>
    %cst_28 = arith.constant dense<0.000000e+00> : vector<1x8xf32>
    %28 = tpu.matmul %24, %16, %cst_28 {dimension_numbers = #tpu.dot_dimension_numbers<[1], [0], [0], [1], [0, 0, 1, 1], [], []>} : vector<1x128xf32>, vector<128x8xf32>, vector<1x8xf32> -> vector<1x8xf32>
    %cst_29 = arith.constant 0.001953125 : f32
    %29 = vector.broadcast %cst_29 : f32 to vector<1x8xf32>
    %30 = arith.mulf %28, %29 : vector<1x8xf32>
    %31 = arith.mulf %27, %27 : vector<1x8xf32>
    %32 = arith.subf %30, %31 : vector<1x8xf32>
    %cst_30 = arith.constant 9.99999974E-6 : f32
    %33 = vector.broadcast %cst_30 : f32 to vector<1x8xf32>
    %34 = arith.addf %32, %33 : vector<1x8xf32>
    %35 = math.rsqrt %34 : vector<1x8xf32>
    %36 = arith.mulf %18, %35 : vector<1x8xf32>
    %37 = arith.mulf %27, %36 : vector<1x8xf32>
    %38 = arith.subf %19, %37 : vector<1x8xf32>
    %cst_31 = arith.constant dense<0.000000e+00> : vector<1x128xf32>
    %39 = tpu.matmul %36, %17, %cst_31 {dimension_numbers = #tpu.dot_dimension_numbers<[1], [0], [0], [1], [0, 0, 1, 1], [], []>} : vector<1x8xf32>, vector<8x128xf32>, vector<1x128xf32> -> vector<1x128xf32>
    %cst_32 = arith.constant dense<0.000000e+00> : vector<1x128xf32>
    %40 = tpu.matmul %38, %17, %cst_32 {dimension_numbers = #tpu.dot_dimension_numbers<[1], [0], [0], [1], [0, 0, 1, 1], [], []>} : vector<1x8xf32>, vector<8x128xf32>, vector<1x128xf32> -> vector<1x128xf32>
    %41 = vector.broadcast %39 : vector<1x128xf32> to vector<32x128xf32>
    %42 = arith.mulf %15, %41 : vector<32x128xf32>
    %43 = vector.broadcast %40 : vector<1x128xf32> to vector<32x128xf32>
    %44 = arith.addf %42, %43 : vector<32x128xf32>
    %cst_33 = arith.constant 0.000000e+00 : f32
    %45 = vector.broadcast %cst_33 : f32 to vector<32x128xf32>
    %46 = arith.maximumf %44, %45 : vector<32x128xf32>
    %cst_34 = arith.constant dense<0.000000e+00> : vector<32x128xf32>
    %47 = tpu.matmul %1, %46, %cst_34 {dimension_numbers = #tpu.dot_dimension_numbers<[1], [0], [0], [1], [0, 0, 1, 1], [], []>} : vector<32x32xf32>, vector<32x128xf32>, vector<32x128xf32> -> vector<32x128xf32>
    %cst_35 = arith.constant dense<0.000000e+00> : vector<32x128xf32>
    %48 = tpu.matmul %2, %46, %cst_35 {dimension_numbers = #tpu.dot_dimension_numbers<[1], [0], [0], [1], [0, 0, 1, 1], [], []>} : vector<32x32xf32>, vector<32x128xf32>, vector<32x128xf32> -> vector<32x128xf32>
    %c0_36 = arith.constant 0 : index
    %c0_37 = arith.constant 0 : index
    %c0_38 = arith.constant 0 : index
    %49 = vector.load %arg2[%c0_36, %c0_37, %c0_38] : memref<3x128x64xf32, #tpu.memory_space<vmem>>, vector<1x128x64xf32>
    %50 = vector.shape_cast %49 : vector<1x128x64xf32> to vector<128x64xf32>
    %cst_39 = arith.constant dense<0.000000e+00> : vector<32x64xf32>
    %51 = tpu.matmul %47, %50, %cst_39 {dimension_numbers = #tpu.dot_dimension_numbers<[1], [0], [0], [1], [0, 0, 1, 1], [], []>} : vector<32x128xf32>, vector<128x64xf32>, vector<32x64xf32> -> vector<32x64xf32>
    %c1_40 = arith.constant 1 : index
    %c0_41 = arith.constant 0 : index
    %c0_42 = arith.constant 0 : index
    %52 = vector.load %arg2[%c1_40, %c0_41, %c0_42] : memref<3x128x64xf32, #tpu.memory_space<vmem>>, vector<1x128x64xf32>
    %53 = vector.shape_cast %52 : vector<1x128x64xf32> to vector<128x64xf32>
    %cst_43 = arith.constant dense<0.000000e+00> : vector<32x64xf32>
    %54 = tpu.matmul %46, %53, %cst_43 {dimension_numbers = #tpu.dot_dimension_numbers<[1], [0], [0], [1], [0, 0, 1, 1], [], []>} : vector<32x128xf32>, vector<128x64xf32>, vector<32x64xf32> -> vector<32x64xf32>
    %55 = arith.addf %51, %54 : vector<32x64xf32>
    %c2_44 = arith.constant 2 : index
    %c0_45 = arith.constant 0 : index
    %c0_46 = arith.constant 0 : index
    %56 = vector.load %arg2[%c2_44, %c0_45, %c0_46] : memref<3x128x64xf32, #tpu.memory_space<vmem>>, vector<1x128x64xf32>
    %57 = vector.shape_cast %56 : vector<1x128x64xf32> to vector<128x64xf32>
    %cst_47 = arith.constant dense<0.000000e+00> : vector<32x64xf32>
    %58 = tpu.matmul %48, %57, %cst_47 {dimension_numbers = #tpu.dot_dimension_numbers<[1], [0], [0], [1], [0, 0, 1, 1], [], []>} : vector<32x128xf32>, vector<128x64xf32>, vector<32x64xf32> -> vector<32x64xf32>
    %59 = arith.addf %55, %58 : vector<32x64xf32>
    %c0_48 = arith.constant 0 : index
    %c0_49 = arith.constant 0 : index
    %60 = vector.load %arg7[%c0_48, %c0_49] : memref<64x4xf32, #tpu.memory_space<vmem>>, vector<64x4xf32>
    %c0_50 = arith.constant 0 : index
    %c0_51 = arith.constant 0 : index
    %61 = vector.load %arg8[%c0_50, %c0_51] : memref<4x64xf32, #tpu.memory_space<vmem>>, vector<4x64xf32>
    %c0_52 = arith.constant 0 : index
    %c0_53 = arith.constant 0 : index
    %62 = vector.load %arg11[%c0_52, %c0_53] : memref<1x4xf32, #tpu.memory_space<vmem>>, vector<1x4xf32>
    %c0_54 = arith.constant 0 : index
    %c0_55 = arith.constant 0 : index
    %63 = vector.load %arg12[%c0_54, %c0_55] : memref<1x4xf32, #tpu.memory_space<vmem>>, vector<1x4xf32>
    %cst_56 = arith.constant dense<0.000000e+00> : vector<64xf32>
    %64 = vector.multi_reduction <add>, %59, %cst_56 [0] : vector<32x64xf32> to vector<64xf32>
    %65 = vector.shape_cast %64 : vector<64xf32> to vector<1x64xf32>
    %66 = arith.mulf %59, %59 : vector<32x64xf32>
    %cst_57 = arith.constant dense<0.000000e+00> : vector<64xf32>
    %67 = vector.multi_reduction <add>, %66, %cst_57 [0] : vector<32x64xf32> to vector<64xf32>
    %68 = vector.shape_cast %67 : vector<64xf32> to vector<1x64xf32>
    %cst_58 = arith.constant dense<0.000000e+00> : vector<1x4xf32>
    %69 = tpu.matmul %65, %60, %cst_58 {dimension_numbers = #tpu.dot_dimension_numbers<[1], [0], [0], [1], [0, 0, 1, 1], [], []>} : vector<1x64xf32>, vector<64x4xf32>, vector<1x4xf32> -> vector<1x4xf32>
    %cst_59 = arith.constant 0.001953125 : f32
    %70 = vector.broadcast %cst_59 : f32 to vector<1x4xf32>
    %71 = arith.mulf %69, %70 : vector<1x4xf32>
    %cst_60 = arith.constant dense<0.000000e+00> : vector<1x4xf32>
    %72 = tpu.matmul %68, %60, %cst_60 {dimension_numbers = #tpu.dot_dimension_numbers<[1], [0], [0], [1], [0, 0, 1, 1], [], []>} : vector<1x64xf32>, vector<64x4xf32>, vector<1x4xf32> -> vector<1x4xf32>
    %cst_61 = arith.constant 0.001953125 : f32
    %73 = vector.broadcast %cst_61 : f32 to vector<1x4xf32>
    %74 = arith.mulf %72, %73 : vector<1x4xf32>
    %75 = arith.mulf %71, %71 : vector<1x4xf32>
    %76 = arith.subf %74, %75 : vector<1x4xf32>
    %cst_62 = arith.constant 9.99999974E-6 : f32
    %77 = vector.broadcast %cst_62 : f32 to vector<1x4xf32>
    %78 = arith.addf %76, %77 : vector<1x4xf32>
    %79 = math.rsqrt %78 : vector<1x4xf32>
    %80 = arith.mulf %62, %79 : vector<1x4xf32>
    %81 = arith.mulf %71, %80 : vector<1x4xf32>
    %82 = arith.subf %63, %81 : vector<1x4xf32>
    %cst_63 = arith.constant dense<0.000000e+00> : vector<1x64xf32>
    %83 = tpu.matmul %80, %61, %cst_63 {dimension_numbers = #tpu.dot_dimension_numbers<[1], [0], [0], [1], [0, 0, 1, 1], [], []>} : vector<1x4xf32>, vector<4x64xf32>, vector<1x64xf32> -> vector<1x64xf32>
    %cst_64 = arith.constant dense<0.000000e+00> : vector<1x64xf32>
    %84 = tpu.matmul %82, %61, %cst_64 {dimension_numbers = #tpu.dot_dimension_numbers<[1], [0], [0], [1], [0, 0, 1, 1], [], []>} : vector<1x4xf32>, vector<4x64xf32>, vector<1x64xf32> -> vector<1x64xf32>
    %85 = vector.broadcast %83 : vector<1x64xf32> to vector<32x64xf32>
    %86 = arith.mulf %59, %85 : vector<32x64xf32>
    %87 = vector.broadcast %84 : vector<1x64xf32> to vector<32x64xf32>
    %88 = arith.addf %86, %87 : vector<32x64xf32>
    %cst_65 = arith.constant 0.000000e+00 : f32
    %89 = vector.broadcast %cst_65 : f32 to vector<32x64xf32>
    %90 = arith.maximumf %88, %89 : vector<32x64xf32>
    %91 = arith.addf %0, %90 : vector<32x64xf32>
    %c0_66 = arith.constant 0 : index
    %c0_67 = arith.constant 0 : index
    %92 = vector.load %arg13[%c0_66, %c0_67] : memref<32x64xf32, #tpu.memory_space<vmem>>, vector<32x64xf32>
    tpu.vector_store %arg13[%c0_66, %c0_67], %91 {strides = array<i32>} : memref<32x64xf32, #tpu.memory_space<vmem>>, vector<32x64xf32>,
    return
  }
}

</mosaic_0001>

<llo_original>
// kernel: tile.14
$region0: #{tile.14}
  %s0 = inlined_call_operand.vmem [shape: f32[16,8,8], index: 0, kind: input, shape index: {}]
  %s1 = inlined_call_operand.vmem [shape: f32[128,8], index: 1, kind: output, shape index: {}]
  %s2 = smov 3
  %v3 = vld [vmem:[%s0] ss:$16 sm:%s2]
  %s4 = smov 12
  %v5 = vld [vmem:[%s0] ss:$16 sm:%s4]
  %vm6 = vcmask 1043458
  %v7 = vsel %vm6, %v5, %v3
  %s8 = smov 48
  %v9 = vld [vmem:[%s0] ss:$16 sm:%s8]
  %vm10 = vcmask 1045508
  %v11 = vsel %vm10, %v9, %v7
  %s12 = smov 192
  %v13 = vld [vmem:[%s0] ss:$16 sm:%s12]
  %vm14 = vcmask 1047558
  %v15 = vsel %vm14, %v13, %v11
  %vm16 = vcmask 64512
  %17 = vst.msk [vmem:[%s1] sm:$0xff] %vm16, %v15
  %s18 = scalar_lea.vmem %s0, 15
  %s19 = smov 3
  %v20 = vld [vmem:[%s18] ss:$16 sm:%s19]
  %s21 = scalar_lea.vmem %s0, 15
  %s22 = smov 12
  %v23 = vld [vmem:[%s21] ss:$16 sm:%s22]
  %vm24 = vcmask 1043458
  %v25 = vsel %vm24, %v23, %v20
  %s26 = scalar_lea.vmem %s0, 15
  %s27 = smov 48
  %v28 = vld [vmem:[%s26] ss:$16 sm:%s27]
  %vm29 = vcmask 1045508
  %v30 = vsel %vm29, %v28, %v25
  %s31 = scalar_lea.vmem %s0, 15
  %s32 = smov 192
  %v33 = vld [vmem:[%s31] ss:$16 sm:%s32]
  %vm34 = vcmask 1047558
  %v35 = vsel %vm34, %v33, %v30
  %36 = vrot.lane.b32.xlu0 %v35, 120
  %v37 = vpop.permute.xlu0 %36
  %vm38 = vcmask 1048512
  %39 = vst.msk [vmem:[%s1] sm:$0xff] %vm38, %v37
  %s40 = scalar_lea.vmem %s0, 14
  %s41 = smov 3
  %v42 = vld [vmem:[%s40] ss:$16 sm:%s41]
  %s43 = scalar_lea.vmem %s0, 14
  %s44 = smov 12
  %v45 = vld [vmem:[%s43] ss:$16 sm:%s44]
  %vm46 = vcmask 1043458
  %v47 = vsel %vm46, %v45, %v42
  %s48 = scalar_lea.vmem %s0, 14
  %s49 = smov 48
  %v50 = vld [vmem:[%s48] ss:$16 sm:%s49]
  %vm51 = vcmask 1045508
  %v52 = vsel %vm51, %v50, %v47
  %s53 = scalar_lea.vmem %s0, 14
  %s54 = smov 192
  %v55 = vld [vmem:[%s53] ss:$16 sm:%s54]
  %vm56 = vcmask 1047558
  %v57 = vsel %vm56, %v55, %v52
  %58 = vrot.lane.b32.xlu0 %v57, 112
  %v59 = vpop.permute.xlu0 %58
  %vm60 = vcmask 982912
  %61 = vst.msk [vmem:[%s1] sm:$0xff] %vm60, %v59
  %s62 = scalar_lea.vmem %s0, 13
  %s63 = smov 3
  %v64 = vld [vmem:[%s62] ss:$16 sm:%s63]
  %s65 = scalar_lea.vmem %s0, 13
  %s66 = smov 12
  %v67 = vld [vmem:[%s65] ss:$16 sm:%s66]
  %vm68 = vcmask 1043458
  %v69 = vsel %vm68, %v67, %v64
  %s70 = scalar_lea.vmem %s0, 13
  %s71 = smov 48
  %v72 = vld [vmem:[%s70] ss:$16 sm:%s71]
  %vm73 = vcmask 1045508
  %v74 = vsel %vm73, %v72, %v69
  %s75 = scalar_lea.vmem %s0, 13
  %s76 = smov 192
  %v77 = vld [vmem:[%s75] ss:$16 sm:%s76]
  %vm78 = vcmask 1047558
  %v79 = vsel %vm78, %v77, %v74
  %80 = vrot.lane.b32.xlu0 %v79, 104
  %v81 = vpop.permute.xlu0 %80
  %vm82 = vcmask 917312
  %83 = vst.msk [vmem:[%s1] sm:$0xff] %vm82, %v81
  %s84 = scalar_lea.vmem %s0, 12
  %s85 = smov 3
  %v86 = vld [vmem:[%s84] ss:$16 sm:%s85]
  %s87 = scalar_lea.vmem %s0, 12
  %s88 = smov 12
  %v89 = vld [vmem:[%s87] ss:$16 sm:%s88]
  %vm90 = vcmask 1043458
  %v91 = vsel %vm90, %v89, %v86
  %s92 = scalar_lea.vmem %s0, 12
  %s93 = smov 48
  %v94 = vld [vmem:[%s92] ss:$16 sm:%s93]
  %vm95 = vcmask 1045508
  %v96 = vsel %vm95, %v94, %v91
  %s97 = scalar_lea.vmem %s0, 12
  %s98 = smov 192
  %v99 = vld [vmem:[%s97] ss:$16 sm:%s98]
  %vm100 = vcmask 1047558
  %v101 = vsel %vm100, %v99, %v96
  %102 = vrot.lane.b32.xlu0 %v101, 96
  %v103 = vpop.permute.xlu0 %102
  %vm104 = vcmask 851712
  %105 = vst.msk [vmem:[%s1] sm:$0xff] %vm104, %v103
  %s106 = scalar_lea.vmem %s0, 11
  %s107 = smov 3
  %v108 = vld [vmem:[%s106] ss:$16 sm:%s107]
  %s109 = scalar_lea.vmem %s0, 11
  %s110 = smov 12
  %v111 = vld [vmem:[%s109] ss:$16 sm:%s110]
  %vm112 = vcmask 1043458
  %v113 = vsel %vm112, %v111, %v108
  %s114 = scalar_lea.vmem %s0, 11
  %s115 = smov 48
  %v116 = vld [vmem:[%s114] ss:$16 sm:%s115]
  %vm117 = vcmask 1045508
  %v118 = vsel %vm117, %v116, %v113
  %s119 = scalar_lea.vmem %s0, 11
  %s120 = smov 192
  %v121 = vld [vmem:[%s119] ss:$16 sm:%s120]
  %vm122 = vcmask 1047558
  %v123 = vsel %vm122, %v121, %v118
  %124 = vrot.lane.b32.xlu0 %v123, 88
  %v125 = vpop.permute.xlu0 %124
  %vm126 = vcmask 786112
  %127 = vst.msk [vmem:[%s1] sm:$0xff] %vm126, %v125
  %s128 = scalar_lea.vmem %s0, 10
  %s129 = smov 3
  %v130 = vld [vmem:[%s128] ss:$16 sm:%s129]
  %s131 = scalar_lea.vmem %s0, 10
  %s132 = smov 12
  %v133 = vld [vmem:[%s131] ss:$16 sm:%s132]
  %vm134 = vcmask 1043458
  %v135 = vsel %vm134, %v133, %v130
  %s136 = scalar_lea.vmem %s0, 10
  %s137 = smov 48
  %v138 = vld [vmem:[%s136] ss:$16 sm:%s137]
  %vm139 = vcmask 1045508
  %v140 = vsel %vm139, %v138, %v135
  %s141 = scalar_lea.vmem %s0, 10
  %s142 = smov 192
  %v143 = vld [vmem:[%s141] ss:$16 sm:%s142]
  %vm144 = vcmask 1047558
  %v145 = vsel %vm144, %v143, %v140
  %146 = vrot.lane.b32.xlu0 %v145, 80
  %v147 = vpop.permute.xlu0 %146
  %vm148 = vcmask 720512
  %149 = vst.msk [vmem:[%s1] sm:$0xff] %vm148, %v147
  %s150 = scalar_lea.vmem %s0, 9
  %s151 = smov 3
  %v152 = vld [vmem:[%s150] ss:$16 sm:%s151]
  %s153 = scalar_lea.vmem %s0, 9
  %s154 = smov 12
  %v155 = vld [vmem:[%s153] ss:$16 sm:%s154]
  %vm156 = vcmask 1043458
  %v157 = vsel %vm156, %v155, %v152
  %s158 = scalar_lea.vmem %s0, 9
  %s159 = smov 48
  %v160 = vld [vmem:[%s158] ss:$16 sm:%s159]
  %vm161 = vcmask 1045508
  %v162 = vsel %vm161, %v160, %v157
  %s163 = scalar_lea.vmem %s0, 9
  %s164 = smov 192
  %v165 = vld [vmem:[%s163] ss:$16 sm:%s164]
  %vm166 = vcmask 1047558
  %v167 = vsel %vm166, %v165, %v162
  %168 = vrot.lane.b32.xlu0 %v167, 72
  %v169 = vpop.permute.xlu0 %168
  %vm170 = vcmask 654912
  %171 = vst.msk [vmem:[%s1] sm:$0xff] %vm170, %v169
  %s172 = scalar_lea.vmem %s0, 8
  %s173 = smov 3
  %v174 = vld [vmem:[%s172] ss:$16 sm:%s173]
  %s175 = scalar_lea.vmem %s0, 8
  %s176 = smov 12
  %v177 = vld [vmem:[%s175] ss:$16 sm:%s176]
  %vm178 = vcmask 1043458
  %v179 = vsel %vm178, %v177, %v174
  %s180 = scalar_lea.vmem %s0, 8
  %s181 = smov 48
  %v182 = vld [vmem:[%s180] ss:$16 sm:%s181]
  %vm183 = vcmask 1045508
  %v184 = vsel %vm183, %v182, %v179
  %s185 = scalar_lea.vmem %s0, 8
  %s186 = smov 192
  %v187 = vld [vmem:[%s185] ss:$16 sm:%s186]
  %vm188 = vcmask 1047558
  %v189 = vsel %vm188, %v187, %v184
  %190 = vrot.lane.b32.xlu0 %v189, 64
  %v191 = vpop.permute.xlu0 %190
  %vm192 = vcmask 589312
  %193 = vst.msk [vmem:[%s1] sm:$0xff] %vm192, %v191
  %s194 = scalar_lea.vmem %s0, 7
  %s195 = smov 3
  %v196 = vld [vmem:[%s194] ss:$16 sm:%s195]
  %s197 = scalar_lea.vmem %s0, 7
  %s198 = smov 12
  %v199 = vld [vmem:[%s197] ss:$16 sm:%s198]
  %vm200 = vcmask 1043458
  %v201 = vsel %vm200, %v199, %v196
  %s202 = scalar_lea.vmem %s0, 7
  %s203 = smov 48
  %v204 = vld [vmem:[%s202] ss:$16 sm:%s203]
  %vm205 = vcmask 1045508
  %v206 = vsel %vm205, %v204, %v201
  %s207 = scalar_lea.vmem %s0, 7
  %s208 = smov 192
  %v209 = vld [vmem:[%s207] ss:$16 sm:%s208]
  %vm210 = vcmask 1047558
  %v211 = vsel %vm210, %v209, %v206
  %212 = vrot.lane.b32.xlu0 %v211, 56
  %v213 = vpop.permute.xlu0 %212
  %vm214 = vcmask 523712
  %215 = vst.msk [vmem:[%s1] sm:$0xff] %vm214, %v213
  %s216 = scalar_lea.vmem %s0, 6
  %s217 = smov 3
  %v218 = vld [vmem:[%s216] ss:$16 sm:%s217]
  %s219 = scalar_lea.vmem %s0, 6
  %s220 = smov 12
  %v221 = vld [vmem:[%s219] ss:$16 sm:%s220]
  %vm222 = vcmask 1043458
  %v223 = vsel %vm222, %v221, %v218
  %s224 = scalar_lea.vmem %s0, 6
  %s225 = smov 48
  %v226 = vld [vmem:[%s224] ss:$16 sm:%s225]
  %vm227 = vcmask 1045508
  %v228 = vsel %vm227, %v226, %v223
  %s229 = scalar_lea.vmem %s0, 6
  %s230 = smov 192
  %v231 = vld [vmem:[%s229] ss:$16 sm:%s230]
  %vm232 = vcmask 1047558
  %v233 = vsel %vm232, %v231, %v228
  %234 = vrot.lane.b32.xlu0 %v233, 48
  %v235 = vpop.permute.xlu0 %234
  %vm236 = vcmask 458112
  %237 = vst.msk [vmem:[%s1] sm:$0xff] %vm236, %v235
  %s238 = scalar_lea.vmem %s0, 5
  %s239 = smov 3
  %v240 = vld [vmem:[%s238] ss:$16 sm:%s239]
  %s241 = scalar_lea.vmem %s0, 5
  %s242 = smov 12
  %v243 = vld [vmem:[%s241] ss:$16 sm:%s242]
  %vm244 = vcmask 1043458
  %v245 = vsel %vm244, %v243, %v240
  %s246 = scalar_lea.vmem %s0, 5
  %s247 = smov 48
  %v248 = vld [vmem:[%s246] ss:$16 sm:%s247]
  %vm249 = vcmask 1045508
  %v250 = vsel %vm249, %v248, %v245
  %s251 = scalar_lea.vmem %s0, 5
  %s252 = smov 192
  %v253 = vld [vmem:[%s251] ss:$16 sm:%s252]
  %vm254 = vcmask 1047558
  %v255 = vsel %vm254, %v253, %v250
  %256 = vrot.lane.b32.xlu0 %v255, 40
  %v257 = vpop.permute.xlu0 %256
  %vm258 = vcmask 392512
  %259 = vst.msk [vmem:[%s1] sm:$0xff] %vm258, %v257
  %s260 = scalar_lea.vmem %s0, 4
  %s261 = smov 3
  %v262 = vld [vmem:[%s260] ss:$16 sm:%s261]
  %s263 = scalar_lea.vmem %s0, 4
  %s264 = smov 12
  %v265 = vld [vmem:[%s263] ss:$16 sm:%s264]
  %vm266 = vcmask 1043458
  %v267 = vsel %vm266, %v265, %v262
  %s268 = scalar_lea.vmem %s0, 4
  %s269 = smov 48
  %v270 = vld [vmem:[%s268] ss:$16 sm:%s269]
  %vm271 = vcmask 1045508
  %v272 = vsel %vm271, %v270, %v267
  %s273 = scalar_lea.vmem %s0, 4
  %s274 = smov 192
  %v275 = vld [vmem:[%s273] ss:$16 sm:%s274]
  %vm276 = vcmask 1047558
  %v277 = vsel %vm276, %v275, %v272
  %278 = vrot.lane.b32.xlu0 %v277, 32
  %v279 = vpop.permute.xlu0 %278
  %vm280 = vcmask 326912
  %281 = vst.msk [vmem:[%s1] sm:$0xff] %vm280, %v279
  %s282 = scalar_lea.vmem %s0, 3
  %s283 = smov 3
  %v284 = vld [vmem:[%s282] ss:$16 sm:%s283]
  %s285 = scalar_lea.vmem %s0, 3
  %s286 = smov 12
  %v287 = vld [vmem:[%s285] ss:$16 sm:%s286]
  %vm288 = vcmask 1043458
  %v289 = vsel %vm288, %v287, %v284
  %s290 = scalar_lea.vmem %s0, 3
  %s291 = smov 48
  %v292 = vld [vmem:[%s290] ss:$16 sm:%s291]
  %vm293 = vcmask 1045508
  %v294 = vsel %vm293, %v292, %v289
  %s295 = scalar_lea.vmem %s0, 3
  %s296 = smov 192
  %v297 = vld [vmem:[%s295] ss:$16 sm:%s296]
  %vm298 = vcmask 1047558
  %v299 = vsel %vm298, %v297, %v294
  %300 = vrot.lane.b32.xlu0 %v299, 24
  %v301 = vpop.permute.xlu0 %300
  %vm302 = vcmask 261312
  %303 = vst.msk [vmem:[%s1] sm:$0xff] %vm302, %v301
  %s304 = scalar_lea.vmem %s0, 2
  %s305 = smov 3
  %v306 = vld [vmem:[%s304] ss:$16 sm:%s305]
  %s307 = scalar_lea.vmem %s0, 2
  %s308 = smov 12
  %v309 = vld [vmem:[%s307] ss:$16 sm:%s308]
  %vm310 = vcmask 1043458
  %v311 = vsel %vm310, %v309, %v306
  %s312 = scalar_lea.vmem %s0, 2
  %s313 = smov 48
  %v314 = vld [vmem:[%s312] ss:$16 sm:%s313]
  %vm315 = vcmask 1045508
  %v316 = vsel %vm315, %v314, %v311
  %s317 = scalar_lea.vmem %s0, 2
  %s318 = smov 192
  %v319 = vld [vmem:[%s317] ss:$16 sm:%s318]
  %vm320 = vcmask 1047558
  %v321 = vsel %vm320, %v319, %v316
  %322 = vrot.lane.b32.xlu0 %v321, 16
  %v323 = vpop.permute.xlu0 %322
  %vm324 = vcmask 195712
  %325 = vst.msk [vmem:[%s1] sm:$0xff] %vm324, %v323
  %s326 = scalar_lea.vmem %s0, 1
  %s327 = smov 3
  %v328 = vld [vmem:[%s326] ss:$16 sm:%s327]
  %s329 = scalar_lea.vmem %s0, 1
  %s330 = smov 12
  %v331 = vld [vmem:[%s329] ss:$16 sm:%s330]
  %vm332 = vcmask 1043458
  %v333 = vsel %vm332, %v331, %v328
  %s334 = scalar_lea.vmem %s0, 1
  %s335 = smov 48
  %v336 = vld [vmem:[%s334] ss:$16 sm:%s335]
  %vm337 = vcmask 1045508
  %v338 = vsel %vm337, %v336, %v333
  %s339 = scalar_lea.vmem %s0, 1
  %s340 = smov 192
  %v341 = vld [vmem:[%s339] ss:$16 sm:%s340]
  %vm342 = vcmask 1047558
  %v343 = vsel %vm342, %v341, %v338
  %344 = vrot.lane.b32.xlu0 %v343, 8
  %v345 = vpop.permute.xlu0 %344
  %vm346 = vcmask 130112
  %347 = vst.msk [vmem:[%s1] sm:$0xff] %vm346, %v345

// kernel: tile.19
$region0: #{tile.19}
  %s0 = inlined_call_operand.vmem [shape: f32[16,4,4], index: 0, kind: input, shape index: {}]
  %s1 = inlined_call_operand.vmem [shape: f32[64,4], index: 1, kind: output, shape index: {}]
  $region1: #{tile.19} parent=0
    #allocation0 [shape = 'u8[4096]{0}', space=vmem, size = 0x1000, scoped, tag = 'scoped mem for output reshape']
    %s2 = smov 3
    %v3 = vld [vmem:[%s0] ss:$16 sm:%s2]
    %s4 = smov 12
    %v5 = vld [vmem:[%s0] ss:$16 sm:%s4]
    %vm6 = vcmask 1043458
    %v7 = vsel %vm6, %v5, %v3
    %vm8 = vcmask 31744
    %9 = vst.msk [vmem:[#allocation0] sm:$0xf] %vm8, %v7
    %s10 = scalar_lea.vmem %s0, 15
    %s11 = smov 3
    %v12 = vld [vmem:[%s10] ss:$16 sm:%s11]
    %s13 = scalar_lea.vmem %s0, 15
    %s14 = smov 12
    %v15 = vld [vmem:[%s13] ss:$16 sm:%s14]
    %vm16 = vcmask 1043458
    %v17 = vsel %vm16, %v15, %v12
    %18 = vrot.lane.b32.xlu0 %v17, 60
    %v19 = vpop.permute.xlu0 %18
    %vm20 = vcmask 523744
    %21 = vst.msk [vmem:[#allocation0] sm:$0xf] %vm20, %v19
    %s22 = scalar_lea.vmem %s0, 14
    %s23 = smov 3
    %v24 = vld [vmem:[%s22] ss:$16 sm:%s23]
    %s25 = scalar_lea.vmem %s0, 14
    %s26 = smov 12
    %v27 = vld [vmem:[%s25] ss:$16 sm:%s26]
    %vm28 = vcmask 1043458
    %v29 = vsel %vm28, %v27, %v24
    %30 = vrot.lane.b32.xlu0 %v29, 56
    %v31 = vpop.permute.xlu0 %30
    %vm32 = vcmask 490944
    %33 = vst.msk [vmem:[#allocation0] sm:$0xf] %vm32, %v31
    %s34 = scalar_lea.vmem %s0, 13
    %s35 = smov 3
    %v36 = vld [vmem:[%s34] ss:$16 sm:%s35]
    %s37 = scalar_lea.vmem %s0, 13
    %s38 = smov 12
    %v39 = vld [vmem:[%s37] ss:$16 sm:%s38]
    %vm40 = vcmask 1043458
    %v41 = vsel %vm40, %v39, %v36
    %42 = vrot.lane.b32.xlu0 %v41, 52
    %v43 = vpop.permute.xlu0 %42
    %vm44 = vcmask 458144
    %45 = vst.msk [vmem:[#allocation0] sm:$0xf] %vm44, %v43
    %s46 = scalar_lea.vmem %s0, 12
    %s47 = smov 3
    %v48 = vld [vmem:[%s46] ss:$16 sm:%s47]
    %s49 = scalar_lea.vmem %s0, 12
    %s50 = smov 12
    %v51 = vld [vmem:[%s49] ss:$16 sm:%s50]
    %vm52 = vcmask 1043458
    %v53 = vsel %vm52, %v51, %v48
    %54 = vrot.lane.b32.xlu0 %v53, 48
    %v55 = vpop.permute.xlu0 %54
    %vm56 = vcmask 425344
    %57 = vst.msk [vmem:[#allocation0] sm:$0xf] %vm56, %v55
    %s58 = scalar_lea.vmem %s0, 11
    %s59 = smov 3
    %v60 = vld [vmem:[%s58] ss:$16 sm:%s59]
    %s61 = scalar_lea.vmem %s0, 11
    %s62 = smov 12
    %v63 = vld [vmem:[%s61] ss:$16 sm:%s62]
    %vm64 = vcmask 1043458
    %v65 = vsel %vm64, %v63, %v60
    %66 = vrot.lane.b32.xlu0 %v65, 44
    %v67 = vpop.permute.xlu0 %66
    %vm68 = vcmask 392544
    %69 = vst.msk [vmem:[#allocation0] sm:$0xf] %vm68, %v67
    %s70 = scalar_lea.vmem %s0, 10
    %s71 = smov 3
    %v72 = vld [vmem:[%s70] ss:$16 sm:%s71]
    %s73 = scalar_lea.vmem %s0, 10
    %s74 = smov 12
    %v75 = vld [vmem:[%s73] ss:$16 sm:%s74]
    %vm76 = vcmask 1043458
    %v77 = vsel %vm76, %v75, %v72
    %78 = vrot.lane.b32.xlu0 %v77, 40
    %v79 = vpop.permute.xlu0 %78
    %vm80 = vcmask 359744
    %81 = vst.msk [vmem:[#allocation0] sm:$0xf] %vm80, %v79
    %s82 = scalar_lea.vmem %s0, 9
    %s83 = smov 3
    %v84 = vld [vmem:[%s82] ss:$16 sm:%s83]
    %s85 = scalar_lea.vmem %s0, 9
    %s86 = smov 12
    %v87 = vld [vmem:[%s85] ss:$16 sm:%s86]
    %vm88 = vcmask 1043458
    %v89 = vsel %vm88, %v87, %v84
    %90 = vrot.lane.b32.xlu0 %v89, 36
    %v91 = vpop.permute.xlu0 %90
    %vm92 = vcmask 326944
    %93 = vst.msk [vmem:[#allocation0] sm:$0xf] %vm92, %v91
    %s94 = scalar_lea.vmem %s0, 8
    %s95 = smov 3
    %v96 = vld [vmem:[%s94] ss:$16 sm:%s95]
    %s97 = scalar_lea.vmem %s0, 8
    %s98 = smov 12
    %v99 = vld [vmem:[%s97] ss:$16 sm:%s98]
    %vm100 = vcmask 1043458
    %v101 = vsel %vm100, %v99, %v96
    %102 = vrot.lane.b32.xlu0 %v101, 32
    %v103 = vpop.permute.xlu0 %102
    %vm104 = vcmask 294144
    %105 = vst.msk [vmem:[#allocation0] sm:$0xf] %vm104, %v103
    %s106 = scalar_lea.vmem %s0, 7
    %s107 = smov 3
    %v108 = vld [vmem:[%s106] ss:$16 sm:%s107]
    %s109 = scalar_lea.vmem %s0, 7
    %s110 = smov 12
    %v111 = vld [vmem:[%s109] ss:$16 sm:%s110]
    %vm112 = vcmask 1043458
    %v113 = vsel %vm112, %v111, %v108
    %114 = vrot.lane.b32.xlu0 %v113, 28
    %v115 = vpop.permute.xlu0 %114
    %vm116 = vcmask 261344
    %117 = vst.msk [vmem:[#allocation0] sm:$0xf] %vm116, %v115
    %s118 = scalar_lea.vmem %s0, 6
    %s119 = smov 3
    %v120 = vld [vmem:[%s118] ss:$16 sm:%s119]
    %s121 = scalar_lea.vmem %s0, 6
    %s122 = smov 12
    %v123 = vld [vmem:[%s121] ss:$16 sm:%s122]
    %vm124 = vcmask 1043458
    %v125 = vsel %vm124, %v123, %v120
    %126 = vrot.lane.b32.xlu0 %v125, 24
    %v127 = vpop.permute.xlu0 %126
    %vm128 = vcmask 228544
    %129 = vst.msk [vmem:[#allocation0] sm:$0xf] %vm128, %v127
    %s130 = scalar_lea.vmem %s0, 5
    %s131 = smov 3
    %v132 = vld [vmem:[%s130] ss:$16 sm:%s131]
    %s133 = scalar_lea.vmem %s0, 5
    %s134 = smov 12
    %v135 = vld [vmem:[%s133] ss:$16 sm:%s134]
    %vm136 = vcmask 1043458
    %v137 = vsel %vm136, %v135, %v132
    %138 = vrot.lane.b32.xlu0 %v137, 20
    %v139 = vpop.permute.xlu0 %138
    %vm140 = vcmask 195744
    %141 = vst.msk [vmem:[#allocation0] sm:$0xf] %vm140, %v139
    %s142 = scalar_lea.vmem %s0, 4
    %s143 = smov 3
    %v144 = vld [vmem:[%s142] ss:$16 sm:%s143]
    %s145 = scalar_lea.vmem %s0, 4
    %s146 = smov 12
    %v147 = vld [vmem:[%s145] ss:$16 sm:%s146]
    %vm148 = vcmask 1043458
    %v149 = vsel %vm148, %v147, %v144
    %150 = vrot.lane.b32.xlu0 %v149, 16
    %v151 = vpop.permute.xlu0 %150
    %vm152 = vcmask 162944
    %153 = vst.msk [vmem:[#allocation0] sm:$0xf] %vm152, %v151
    %s154 = scalar_lea.vmem %s0, 3
    %s155 = smov 3
    %v156 = vld [vmem:[%s154] ss:$16 sm:%s155]
    %s157 = scalar_lea.vmem %s0, 3
    %s158 = smov 12
    %v159 = vld [vmem:[%s157] ss:$16 sm:%s158]
    %vm160 = vcmask 1043458
    %v161 = vsel %vm160, %v159, %v156
    %162 = vrot.lane.b32.xlu0 %v161, 12
    %v163 = vpop.permute.xlu0 %162
    %vm164 = vcmask 130144
    %165 = vst.msk [vmem:[#allocation0] sm:$0xf] %vm164, %v163
    %s166 = scalar_lea.vmem %s0, 2
    %s167 = smov 3
    %v168 = vld [vmem:[%s166] ss:$16 sm:%s167]
    %s169 = scalar_lea.vmem %s0, 2
    %s170 = smov 12
    %v171 = vld [vmem:[%s169] ss:$16 sm:%s170]
    %vm172 = vcmask 1043458
    %v173 = vsel %vm172, %v171, %v168
    %174 = vrot.lane.b32.xlu0 %v173, 8
    %v175 = vpop.permute.xlu0 %174
    %vm176 = vcmask 97344
    %177 = vst.msk [vmem:[#allocation0] sm:$0xf] %vm176, %v175
    %s178 = scalar_lea.vmem %s0, 1
    %s179 = smov 3
    %v180 = vld [vmem:[%s178] ss:$16 sm:%s179]
    %s181 = scalar_lea.vmem %s0, 1
    %s182 = smov 12
    %v183 = vld [vmem:[%s181] ss:$16 sm:%s182]
    %vm184 = vcmask 1043458
    %v185 = vsel %vm184, %v183, %v180
    %186 = vrot.lane.b32.xlu0 %v185, 4
    %v187 = vpop.permute.xlu0 %186
    %vm188 = vcmask 64544
    %189 = vst.msk [vmem:[#allocation0] sm:$0xf] %vm188, %v187
    %s191 = sshllo.u32 0, 4
    %v193 = vld [vmem:[#allocation0] sm:%s191]
    %s194 = sshllo.u32 0, 4
    %195 = vst [vmem:[%s1] sm:%s194] %v193

// kernel: resblock_forward.1
$region0: #{resblock_forward.1}
  #allocation0 [shape = 'u32[]', space=smem, size = 0x4, offset = 0x4, fixed_abs, tag = 'smem constant byte address 0x4 - core index']
  #allocation1 [shape = 'u32[144,128]{1,0:T(1,128)}', space=vmem, size = 0x12000, scoped, tag = 'internal scratch']
  %s0 = inlined_call_operand.vmem [shape: f32[32,64], index: 0, kind: input, shape index: {}]
  %s1 = inlined_call_operand.vmem [shape: f32[3,64,128], index: 1, kind: input, shape index: {}]
  %s2 = inlined_call_operand.vmem [shape: f32[3,128,64], index: 2, kind: input, shape index: {}]
  %s3 = inlined_call_operand.vmem [shape: f32[32,32], index: 3, kind: input, shape index: {}]
  %s4 = inlined_call_operand.vmem [shape: f32[32,32], index: 4, kind: input, shape index: {}]
  %s5 = inlined_call_operand.vmem [shape: f32[128,8], index: 5, kind: input, shape index: {}]
  %s6 = inlined_call_operand.vmem [shape: f32[8,128], index: 6, kind: input, shape index: {}]
  %s7 = inlined_call_operand.vmem [shape: f32[64,4], index: 7, kind: input, shape index: {}]
  %s8 = inlined_call_operand.vmem [shape: f32[4,64], index: 8, kind: input, shape index: {}]
  %s9 = inlined_call_operand.vmem [shape: f32[1,8], index: 9, kind: input, shape index: {}]
  %s10 = inlined_call_operand.vmem [shape: f32[1,8], index: 10, kind: input, shape index: {}]
  %s11 = inlined_call_operand.vmem [shape: f32[1,4], index: 11, kind: input, shape index: {}]
  %s12 = inlined_call_operand.vmem [shape: f32[1,4], index: 12, kind: input, shape index: {}]
  %s13 = inlined_call_operand.vmem [shape: f32[32,64], index: 13, kind: output, shape index: {}]
  %s14 = sld [smem:[#allocation0]]
  $region62: #{resblock_forward.1} parent=0
    _
  %s16 = ssub.s32 1, %s14
  %s17 = scalar_select 0, %s16, %s14
  // Predicated region
  $region2: #{resblock_forward.1} parent=0 // pred_check
    _
  $region3: #{resblock_forward.1} parent=0 // pred_check_branch
    %19 = sbr.rel (0) target = $region5
  $region4: #{resblock_forward.1} parent=0 // pred_region
    _
  $region5: #{resblock_forward.1} parent=0 // pred_fallthru
    _
  // Predicated region
  $region6: #{resblock_forward.1} parent=0 // pred_check
    _
  $region7: #{resblock_forward.1} parent=0 // pred_check_branch
    %21 = sbr.rel (0) target = $region9
  $region8: #{resblock_forward.1} parent=0 // pred_region
    _
  $region9: #{resblock_forward.1} parent=0 // pred_fallthru
    _
  // Predicated region
  $region10: #{resblock_forward.1} parent=0 // pred_check
    _
  $region11: #{resblock_forward.1} parent=0 // pred_check_branch
    %23 = sbr.rel (0) target = $region13
  $region12: #{resblock_forward.1} parent=0 // pred_region
    _
  $region13: #{resblock_forward.1} parent=0 // pred_fallthru
    _
  // Predicated region
  $region14: #{resblock_forward.1} parent=0 // pred_check
    _
  $region15: #{resblock_forward.1} parent=0 // pred_check_branch
    %25 = sbr.rel (0) target = $region17
  $region16: #{resblock_forward.1} parent=0 // pred_region
    _
  $region17: #{resblock_forward.1} parent=0 // pred_fallthru
    _
  // Predicated region
  $region18: #{resblock_forward.1} parent=0 // pred_check
    _
  $region19: #{resblock_forward.1} parent=0 // pred_check_branch
    %27 = sbr.rel (0) target = $region21
  $region20: #{resblock_forward.1} parent=0 // pred_region
    _
  $region21: #{resblock_forward.1} parent=0 // pred_fallthru
    _
  // Predicated region
  $region22: #{resblock_forward.1} parent=0 // pred_check
    _
  $region23: #{resblock_forward.1} parent=0 // pred_check_branch
    %29 = sbr.rel (0) target = $region25
  $region24: #{resblock_forward.1} parent=0 // pred_region
    _
  $region25: #{resblock_forward.1} parent=0 // pred_fallthru
    _
  // Predicated region
  $region26: #{resblock_forward.1} parent=0 // pred_check
    _
  $region27: #{resblock_forward.1} parent=0 // pred_check_branch
    %31 = sbr.rel (0) target = $region29
  $region28: #{resblock_forward.1} parent=0 // pred_region
    _
  $region29: #{resblock_forward.1} parent=0 // pred_fallthru
    _
  // Predicated region
  $region30: #{resblock_forward.1} parent=0 // pred_check
    _
  $region31: #{resblock_forward.1} parent=0 // pred_check_branch
    %33 = sbr.rel (0) target = $region33
  $region32: #{resblock_forward.1} parent=0 // pred_region
    _
  $region33: #{resblock_forward.1} parent=0 // pred_fallthru
    _
  // Predicated region
  $region34: #{resblock_forward.1} parent=0 // pred_check
    _
  $region35: #{resblock_forward.1} parent=0 // pred_check_branch
    %35 = sbr.rel (0) target = $region37
  $region36: #{resblock_forward.1} parent=0 // pred_region
    _
  $region37: #{resblock_forward.1} parent=0 // pred_fallthru
    _
  // Predicated region
  $region38: #{resblock_forward.1} parent=0 // pred_check
    _
  $region39: #{resblock_forward.1} parent=0 // pred_check_branch
    %37 = sbr.rel (0) target = $region41
  $region40: #{resblock_forward.1} parent=0 // pred_region
    _
  $region41: #{resblock_forward.1} parent=0 // pred_fallthru
    _
  // Predicated region
  $region42: #{resblock_forward.1} parent=0 // pred_check
    _
  $region43: #{resblock_forward.1} parent=0 // pred_check_branch
    %39 = sbr.rel (0) target = $region45
  $region44: #{resblock_forward.1} parent=0 // pred_region
    _
  $region45: #{resblock_forward.1} parent=0 // pred_fallthru
    _
  // Predicated region
  $region46: #{resblock_forward.1} parent=0 // pred_check
    _
  $region47: #{resblock_forward.1} parent=0 // pred_check_branch
    %41 = sbr.rel (0) target = $region49
  $region48: #{resblock_forward.1} parent=0 // pred_region
    _
  $region49: #{resblock_forward.1} parent=0 // pred_fallthru
    _
  // Predicated region
  $region50: #{resblock_forward.1} parent=0 // pred_check
    _
  $region51: #{resblock_forward.1} parent=0 // pred_check_branch
    %43 = sbr.rel (0) target = $region53
  $region52: #{resblock_forward.1} parent=0 // pred_region
    _
  $region53: #{resblock_forward.1} parent=0 // pred_fallthru
    _
  %v44 = vld [vmem:[%s0] sm:$0xff]
  %v45 = vld [vmem:[%s0 + $0x8] sm:$0xff]
  %v46 = vld [vmem:[%s0 + $0x10] sm:$0xff]
  %v47 = vld [vmem:[%s0 + $0x18] sm:$0xff]
  %v48 = vld [vmem:[%s3] sm:$0xff]
  %v49 = vld [vmem:[%s3 + $0x8] sm:$0xff]
  %v50 = vld [vmem:[%s3 + $0x10] sm:$0xff]
  %v51 = vld [vmem:[%s3 + $0x18] sm:$0xff]
  %v52 = vld [vmem:[%s4] sm:$0xff]
  %v53 = vld [vmem:[%s4 + $0x8] sm:$0xff]
  %v54 = vld [vmem:[%s4 + $0x10] sm:$0xff]
  %v55 = vld [vmem:[%s4 + $0x18] sm:$0xff]
  %vm56 = vcmask 261120
  %v58 = vsel %vm56, %v48, 0
  %v61 = vsel %vm56, %v49, 0
  %v64 = vsel %vm56, %v50, 0
  %v67 = vsel %vm56, %v51, 0
  %69 = vmatprep.subr.mxu0 0.0
  %70 = vmatpush1.msra.mxu0 %v44
  %71 = vmatprep.subr.mxu0 0.0
  %72 = vmatpush1.msra.mxu0 %v45
  %73 = vmatprep.subr.mxu0 0.0
  %74 = vmatpush1.msra.mxu0 %v46
  %75 = vmatprep.subr.mxu0 0.0
  %76 = vmatpush1.msra.mxu0 %v47
  %77 = vmatprep.subr.mxu0 0.0
  %78 = vmatpush1.msra.mxu0 0.0
  %79 = vmatprep.subr.mxu0 0.0
  %80 = vmatpush1.msra.mxu0 0.0
  %81 = vmatprep.subr.mxu0 0.0
  %82 = vmatpush1.msra.mxu0 0.0
  %83 = vmatprep.subr.mxu0 0.0
  %84 = vmatpush1.msra.mxu0 0.0
  %85 = vmatprep.subr.mxu0 0.0
  %86 = vmatpush1.msra.mxu0 0.0
  %87 = vmatprep.subr.mxu0 0.0
  %88 = vmatpush1.msra.mxu0 0.0
  %89 = vmatprep.subr.mxu0 0.0
  %90 = vmatpush1.msra.mxu0 0.0
  %91 = vmatprep.subr.mxu0 0.0
  %92 = vmatpush1.msra.mxu0 0.0
  %93 = vmatprep.subr.mxu0 0.0
  %94 = vmatpush1.msra.mxu0 0.0
  %95 = vmatprep.subr.mxu0 0.0
  %96 = vmatpush1.msra.mxu0 0.0
  %97 = vmatprep.subr.mxu0 0.0
  %98 = vmatpush1.msra.mxu0 0.0
  %99 = vmatprep.subr.mxu0 0.0
  %100 = vmatpush1.msra.mxu0 0.0
  %101 = vmatprep.subr.mxu0 0.0
  %102 = vmatpush1.msra.mxu0 0.0
  %103 = vmatprep.subr.mxu0 0.0
  %104 = vmatpush1.msra.mxu0 0.0
  %105 = vmatprep.subr.mxu0 0.0
  %106 = vmatpush1.msra.mxu0 0.0
  %107 = vmatprep.subr.mxu0 0.0
  %108 = vmatpush1.msra.mxu0 0.0
  %109 = vmatprep.subr.mxu0 0.0
  %110 = vmatpush1.msra.mxu0 0.0
  %111 = vmatprep.subr.mxu0 0.0
  %112 = vmatpush1.msra.mxu0 0.0
  %113 = vmatprep.subr.mxu0 0.0
  %114 = vmatpush1.msra.mxu0 0.0
  %115 = vmatprep.subr.mxu0 0.0
  %116 = vmatpush1.msra.mxu0 0.0
  %117 = vmatprep.subr.mxu0 0.0
  %118 = vmatpush1.msra.mxu0 0.0
  %119 = vmatprep.subr.mxu0 0.0
  %120 = vmatpush1.msra.mxu0 0.0
  %121 = vmatprep.subr.mxu0 0.0
  %122 = vmatpush1.msra.mxu0 0.0
  %123 = vmatprep.subr.mxu0 0.0
  %124 = vmatpush1.msra.mxu0 0.0
  %125 = vmatprep.subr.mxu0 0.0
  %126 = vmatpush1.msra.mxu0 0.0
  %127 = vmatprep.subr.mxu0 0.0
  %128 = vmatpush1.msra.mxu0 0.0
  %129 = vmatprep.subr.mxu0 0.0
  %130 = vmatpush1.msra.mxu0 0.0
  %131 = vmatprep.subr.mxu0 0.0
  %132 = vmatpush1.msra.mxu0 0.0
  %133 = vmatprep.mubr.f32.mxu0 0.0
  %134 = vmatmul.mubr.f32.gmra.mrb[0].mxu0 %v58
  %v135 = vpop.f32.mrb[0].mxu0
  %v136 = vadd.f32 0.0, %v135
  %v137 = vpop.f32.mrb[0].mxu0
  %138 = vmatprep.mubr.f32.mxu0 0.0
  %139 = vmatmul.mubr.f32.gmra.mrb[0].mxu0 %v61
  %v140 = vpop.f32.mrb[0].mxu0
  %v141 = vadd.f32 0.0, %v140
  %v142 = vpop.f32.mrb[0].mxu0
  %143 = vmatprep.mubr.f32.mxu0 0.0
  %144 = vmatmul.mubr.f32.gmra.mrb[0].mxu0 %v64
  %v145 = vpop.f32.mrb[0].mxu0
  %v146 = vadd.f32 0.0, %v145
  %v147 = vpop.f32.mrb[0].mxu0
  %148 = vmatprep.mubr.f32.mxu0 0.0
  %149 = vmatmul.mubr.f32.gmra.mrb[0].mxu0 %v67
  %v150 = vpop.f32.mrb[0].mxu0
  %v151 = vadd.f32 0.0, %v150
  %v152 = vpop.f32.mrb[0].mxu0
  %153 = vdwg.mxu0
  %v155 = vsel %vm56, %v52, 0
  %v158 = vsel %vm56, %v53, 0
  %v161 = vsel %vm56, %v54, 0
  %v164 = vsel %vm56, %v55, 0
  %166 = vmatprep.subr.mxu0 0.0
  %167 = vmatpush1.msra.mxu0 %v44
  %168 = vmatprep.subr.mxu0 0.0
  %169 = vmatpush1.msra.mxu0 %v45
  %170 = vmatprep.subr.mxu0 0.0
  %171 = vmatpush1.msra.mxu0 %v46
  %172 = vmatprep.subr.mxu0 0.0
  %173 = vmatpush1.msra.mxu0 %v47
  %174 = vmatprep.subr.mxu0 0.0
  %175 = vmatpush1.msra.mxu0 0.0
  %176 = vmatprep.subr.mxu0 0.0
  %177 = vmatpush1.msra.mxu0 0.0
  %178 = vmatprep.subr.mxu0 0.0
  %179 = vmatpush1.msra.mxu0 0.0
  %180 = vmatprep.subr.mxu0 0.0
  %181 = vmatpush1.msra.mxu0 0.0
  %182 = vmatprep.subr.mxu0 0.0
  %183 = vmatpush1.msra.mxu0 0.0
  %184 = vmatprep.subr.mxu0 0.0
  %185 = vmatpush1.msra.mxu0 0.0
  %186 = vmatprep.subr.mxu0 0.0
  %187 = vmatpush1.msra.mxu0 0.0
  %188 = vmatprep.subr.mxu0 0.0
  %189 = vmatpush1.msra.mxu0 0.0
  %190 = vmatprep.subr.mxu0 0.0
  %191 = vmatpush1.msra.mxu0 0.0
  %192 = vmatprep.subr.mxu0 0.0
  %193 = vmatpush1.msra.mxu0 0.0
  %194 = vmatprep.subr.mxu0 0.0
  %195 = vmatpush1.msra.mxu0 0.0
  %196 = vmatprep.subr.mxu0 0.0
  %197 = vmatpush1.msra.mxu0 0.0
  %198 = vmatprep.subr.mxu0 0.0
  %199 = vmatpush1.msra.mxu0 0.0
  %200 = vmatprep.subr.mxu0 0.0
  %201 = vmatpush1.msra.mxu0 0.0
  %202 = vmatprep.subr.mxu0 0.0
  %203 = vmatpush1.msra.mxu0 0.0
  %204 = vmatprep.subr.mxu0 0.0
  %205 = vmatpush1.msra.mxu0 0.0
  %206 = vmatprep.subr.mxu0 0.0
  %207 = vmatpush1.msra.mxu0 0.0
  %208 = vmatprep.subr.mxu0 0.0
  %209 = vmatpush1.msra.mxu0 0.0
  %210 = vmatprep.subr.mxu0 0.0
  %211 = vmatpush1.msra.mxu0 0.0
  %212 = vmatprep.subr.mxu0 0.0
  %213 = vmatpush1.msra.mxu0 0.0
  %214 = vmatprep.subr.mxu0 0.0
  %215 = vmatpush1.msra.mxu0 0.0
  %216 = vmatprep.subr.mxu0 0.0
  %217 = vmatpush1.msra.mxu0 0.0
  %218 = vmatprep.subr.mxu0 0.0
  %219 = vmatpush1.msra.mxu0 0.0
  %220 = vmatprep.subr.mxu0 0.0
  %221 = vmatpush1.msra.mxu0 0.0
  %222 = vmatprep.subr.mxu0 0.0
  %223 = vmatpush1.msra.mxu0 0.0
  %224 = vmatprep.subr.mxu0 0.0
  %225 = vmatpush1.msra.mxu0 0.0
  %226 = vmatprep.subr.mxu0 0.0
  %227 = vmatpush1.msra.mxu0 0.0
  %228 = vmatprep.subr.mxu0 0.0
  %229 = vmatpush1.msra.mxu0 0.0
  %230 = vmatprep.mubr.f32.mxu0 0.0
  %231 = vmatmul.mubr.f32.gmra.mrb[0].mxu0 %v155
  %v232 = vpop.f32.mrb[0].mxu0
  %v233 = vadd.f32 0.0, %v232
  %v234 = vpop.f32.mrb[0].mxu0
  %235 = vmatprep.mubr.f32.mxu0 0.0
  %236 = vmatmul.mubr.f32.gmra.mrb[0].mxu0 %v158
  %v237 = vpop.f32.mrb[0].mxu0
  %v238 = vadd.f32 0.0, %v237
  %v239 = vpop.f32.mrb[0].mxu0
  %240 = vmatprep.mubr.f32.mxu0 0.0
  %241 = vmatmul.mubr.f32.gmra.mrb[0].mxu0 %v161
  %v242 = vpop.f32.mrb[0].mxu0
  %v243 = vadd.f32 0.0, %v242
  %v244 = vpop.f32.mrb[0].mxu0
  %245 = vmatprep.mubr.f32.mxu0 0.0
  %246 = vmatmul.mubr.f32.gmra.mrb[0].mxu0 %v164
  %v247 = vpop.f32.mrb[0].mxu0
  %v248 = vadd.f32 0.0, %v247
  %v249 = vpop.f32.mrb[0].mxu0
  %250 = vdwg.mxu0
  %v251 = vld [vmem:[%s1] sm:$0xff]
  %v252 = vld [vmem:[%s1 + $0x8] sm:$0xff]
  %v253 = vld [vmem:[%s1 + $0x10] sm:$0xff]
  %v254 = vld [vmem:[%s1 + $0x18] sm:$0xff]
  %v255 = vld [vmem:[%s1 + $0x20] sm:$0xff]
  %v256 = vld [vmem:[%s1 + $0x28] sm:$0xff]
  %v257 = vld [vmem:[%s1 + $0x30] sm:$0xff]
  %v258 = vld [vmem:[%s1 + $0x38] sm:$0xff]
  %s259 = scalar_lea.vmem %s1, 64
  %v260 = vld [vmem:[%s259] sm:$0xff]
  %v261 = vld [vmem:[%s259 + $0x8] sm:$0xff]
  %v262 = vld [vmem:[%s259 + $0x10] sm:$0xff]
  %v263 = vld [vmem:[%s259 + $0x18] sm:$0xff]
  %v264 = vld [vmem:[%s259 + $0x20] sm:$0xff]
  %v265 = vld [vmem:[%s259 + $0x28] sm:$0xff]
  %v266 = vld [vmem:[%s259 + $0x30] sm:$0xff]
  %v267 = vld [vmem:[%s259 + $0x38] sm:$0xff]
  %vm268 = vcmask 523264
  %v270 = vsel %vm268, %v44, 0
  %v273 = vsel %vm268, %v45, 0
  %v276 = vsel %vm268, %v46, 0
  %v279 = vsel %vm268, %v47, 0
  %281 = vmatprep.subr.mxu0 0.0
  %282 = vmatpush1.msra.mxu0 %v260
  %283 = vmatprep.subr.mxu0 0.0
  %284 = vmatpush1.msra.mxu0 %v261
  %285 = vmatprep.subr.mxu0 0.0
  %286 = vmatpush1.msra.mxu0 %v262
  %287 = vmatprep.subr.mxu0 0.0
  %288 = vmatpush1.msra.mxu0 %v263
  %289 = vmatprep.subr.mxu0 0.0
  %290 = vmatpush1.msra.mxu0 %v264
  %291 = vmatprep.subr.mxu0 0.0
  %292 = vmatpush1.msra.mxu0 %v265
  %293 = vmatprep.subr.mxu0 0.0
  %294 = vmatpush1.msra.mxu0 %v266
  %295 = vmatprep.subr.mxu0 0.0
  %296 = vmatpush1.msra.mxu0 %v267
  %297 = vmatprep.subr.mxu0 0.0
  %298 = vmatpush1.msra.mxu0 0.0
  %299 = vmatprep.subr.mxu0 0.0
  %300 = vmatpush1.msra.mxu0 0.0
  %301 = vmatprep.subr.mxu0 0.0
  %302 = vmatpush1.msra.mxu0 0.0
  %303 = vmatprep.subr.mxu0 0.0
  %304 = vmatpush1.msra.mxu0 0.0
  %305 = vmatprep.subr.mxu0 0.0
  %306 = vmatpush1.msra.mxu0 0.0
  %307 = vmatprep.subr.mxu0 0.0
  %308 = vmatpush1.msra.mxu0 0.0
  %309 = vmatprep.subr.mxu0 0.0
  %310 = vmatpush1.msra.mxu0 0.0
  %311 = vmatprep.subr.mxu0 0.0
  %312 = vmatpush1.msra.mxu0 0.0
  %313 = vmatprep.subr.mxu0 0.0
  %314 = vmatpush1.msra.mxu0 0.0
  %315 = vmatprep.subr.mxu0 0.0
  %316 = vmatpush1.msra.mxu0 0.0
  %317 = vmatprep.subr.mxu0 0.0
  %318 = vmatpush1.msra.mxu0 0.0
  %319 = vmatprep.subr.mxu0 0.0
  %320 = vmatpush1.msra.mxu0 0.0
  %321 = vmatprep.subr.mxu0 0.0
  %322 = vmatpush1.msra.mxu0 0.0
  %323 = vmatprep.subr.mxu0 0.0
  %324 = vmatpush1.msra.mxu0 0.0
  %325 = vmatprep.subr.mxu0 0.0
  %326 = vmatpush1.msra.mxu0 0.0
  %327 = vmatprep.subr.mxu0 0.0
  %328 = vmatpush1.msra.mxu0 0.0
  %329 = vmatprep.subr.mxu0 0.0
  %330 = vmatpush1.msra.mxu0 0.0
  %331 = vmatprep.subr.mxu0 0.0
  %332 = vmatpush1.msra.mxu0 0.0
  %333 = vmatprep.subr.mxu0 0.0
  %334 = vmatpush1.msra.mxu0 0.0
  %335 = vmatprep.subr.mxu0 0.0
  %336 = vmatpush1.msra.mxu0 0.0
  %337 = vmatprep.subr.mxu0 0.0
  %338 = vmatpush1.msra.mxu0 0.0
  %339 = vmatprep.subr.mxu0 0.0
  %340 = vmatpush1.msra.mxu0 0.0
  %341 = vmatprep.subr.mxu0 0.0
  %342 = vmatpush1.msra.mxu0 0.0
  %343 = vmatprep.subr.mxu0 0.0
  %344 = vmatpush1.msra.mxu0 0.0
  %345 = vmatprep.mubr.f32.mxu0 0.0
  %346 = vmatmul.mubr.f32.gmra.mrb[0].mxu0 %v270
  %v347 = vpop.f32.mrb[0].mxu0
  %v348 = vadd.f32 0.0, %v347
  %v349 = vpop.f32.mrb[0].mxu0
  %350 = vmatprep.mubr.f32.mxu0 0.0
  %351 = vmatmul.mubr.f32.gmra.mrb[0].mxu0 %v273
  %v352 = vpop.f32.mrb[0].mxu0
  %v353 = vadd.f32 0.0, %v352
  %v354 = vpop.f32.mrb[0].mxu0
  %355 = vmatprep.mubr.f32.mxu0 0.0
  %356 = vmatmul.mubr.f32.gmra.mrb[0].mxu0 %v276
  %v357 = vpop.f32.mrb[0].mxu0
  %v358 = vadd.f32 0.0, %v357
  %v359 = vpop.f32.mrb[0].mxu0
  %360 = vmatprep.mubr.f32.mxu0 0.0
  %361 = vmatmul.mubr.f32.gmra.mrb[0].mxu0 %v279
  %v362 = vpop.f32.mrb[0].mxu0
  %v363 = vadd.f32 0.0, %v362
  %v364 = vpop.f32.mrb[0].mxu0
  %365 = vdwg.mxu0
  %v367 = vsel %vm268, %v136, 0
  %v370 = vsel %vm268, %v141, 0
  %v373 = vsel %vm268, %v146, 0
  %v376 = vsel %vm268, %v151, 0
  %378 = vmatprep.subr.mxu0 0.0
  %379 = vmatpush1.msra.mxu0 %v251
  %380 = vmatprep.subr.mxu0 0.0
  %381 = vmatpush1.msra.mxu0 %v252
  %382 = vmatprep.subr.mxu0 0.0
  %383 = vmatpush1.msra.mxu0 %v253
  %384 = vmatprep.subr.mxu0 0.0
  %385 = vmatpush1.msra.mxu0 %v254
  %386 = vmatprep.subr.mxu0 0.0
  %387 = vmatpush1.msra.mxu0 %v255
  %388 = vmatprep.subr.mxu0 0.0
  %389 = vmatpush1.msra.mxu0 %v256
  %390 = vmatprep.subr.mxu0 0.0
  %391 = vmatpush1.msra.mxu0 %v257
  %392 = vmatprep.subr.mxu0 0.0
  %393 = vmatpush1.msra.mxu0 %v258
  %394 = vmatprep.subr.mxu0 0.0
  %395 = vmatpush1.msra.mxu0 0.0
  %396 = vmatprep.subr.mxu0 0.0
  %397 = vmatpush1.msra.mxu0 0.0
  %398 = vmatprep.subr.mxu0 0.0
  %399 = vmatpush1.msra.mxu0 0.0
  %400 = vmatprep.subr.mxu0 0.0
  %401 = vmatpush1.msra.mxu0 0.0
  %402 = vmatprep.subr.mxu0 0.0
  %403 = vmatpush1.msra.mxu0 0.0
  %404 = vmatprep.subr.mxu0 0.0
  %405 = vmatpush1.msra.mxu0 0.0
  %406 = vmatprep.subr.mxu0 0.0
  %407 = vmatpush1.msra.mxu0 0.0
  %408 = vmatprep.subr.mxu0 0.0
  %409 = vmatpush1.msra.mxu0 0.0
  %410 = vmatprep.subr.mxu0 0.0
  %411 = vmatpush1.msra.mxu0 0.0
  %412 = vmatprep.subr.mxu0 0.0
  %413 = vmatpush1.msra.mxu0 0.0
  %414 = vmatprep.subr.mxu0 0.0
  %415 = vmatpush1.msra.mxu0 0.0
  %416 = vmatprep.subr.mxu0 0.0
  %417 = vmatpush1.msra.mxu0 0.0
  %418 = vmatprep.subr.mxu0 0.0
  %419 = vmatpush1.msra.mxu0 0.0
  %420 = vmatprep.subr.mxu0 0.0
  %421 = vmatpush1.msra.mxu0 0.0
  %422 = vmatprep.subr.mxu0 0.0
  %423 = vmatpush1.msra.mxu0 0.0
  %424 = vmatprep.subr.mxu0 0.0
  %425 = vmatpush1.msra.mxu0 0.0
  %426 = vmatprep.subr.mxu0 0.0
  %427 = vmatpush1.msra.mxu0 0.0
  %428 = vmatprep.subr.mxu0 0.0
  %429 = vmatpush1.msra.mxu0 0.0
  %430 = vmatprep.subr.mxu0 0.0
  %431 = vmatpush1.msra.mxu0 0.0
  %432 = vmatprep.subr.mxu0 0.0
  %433 = vmatpush1.msra.mxu0 0.0
  %434 = vmatprep.subr.mxu0 0.0
  %435 = vmatpush1.msra.mxu0 0.0
  %436 = vmatprep.subr.mxu0 0.0
  %437 = vmatpush1.msra.mxu0 0.0
  %438 = vmatprep.subr.mxu0 0.0
  %439 = vmatpush1.msra.mxu0 0.0
  %440 = vmatprep.subr.mxu0 0.0
  %441 = vmatpush1.msra.mxu0 0.0
  %442 = vmatprep.mubr.f32.mxu0 0.0
  %443 = vmatmul.mubr.f32.gmra.mrb[0].mxu0 %v367
  %v444 = vpop.f32.mrb[0].mxu0
  %v445 = vadd.f32 %v348, %v444
  %v446 = vpop.f32.mrb[0].mxu0
  %447 = vmatprep.mubr.f32.mxu0 0.0
  %448 = vmatmul.mubr.f32.gmra.mrb[0].mxu0 %v370
  %v449 = vpop.f32.mrb[0].mxu0
  %v450 = vadd.f32 %v353, %v449
  %v451 = vpop.f32.mrb[0].mxu0
  %452 = vmatprep.mubr.f32.mxu0 0.0
  %453 = vmatmul.mubr.f32.gmra.mrb[0].mxu0 %v373
  %v454 = vpop.f32.mrb[0].mxu0
  %v455 = vadd.f32 %v358, %v454
  %v456 = vpop.f32.mrb[0].mxu0
  %457 = vmatprep.mubr.f32.mxu0 0.0
  %458 = vmatmul.mubr.f32.gmra.mrb[0].mxu0 %v376
  %v459 = vpop.f32.mrb[0].mxu0
  %v460 = vadd.f32 %v363, %v459
  %v461 = vpop.f32.mrb[0].mxu0
  %462 = vdwg.mxu0
  %s463 = scalar_lea.vmem %s1, 128
  %v464 = vld [vmem:[%s463] sm:$0xff]
  %v465 = vld [vmem:[%s463 + $0x8] sm:$0xff]
  %v466 = vld [vmem:[%s463 + $0x10] sm:$0xff]
  %v467 = vld [vmem:[%s463 + $0x18] sm:$0xff]
  %v468 = vld [vmem:[%s463 + $0x20] sm:$0xff]
  %v469 = vld [vmem:[%s463 + $0x28] sm:$0xff]
  %v470 = vld [vmem:[%s463 + $0x30] sm:$0xff]
  %v471 = vld [vmem:[%s463 + $0x38] sm:$0xff]
  %v473 = vsel %vm268, %v233, 0
  %v476 = vsel %vm268, %v238, 0
  %v479 = vsel %vm268, %v243, 0
  %v482 = vsel %vm268, %v248, 0
  %484 = vmatprep.subr.mxu0 0.0
  %485 = vmatpush1.msra.mxu0 %v464
  %486 = vmatprep.subr.mxu0 0.0
  %487 = vmatpush1.msra.mxu0 %v465
  %488 = vmatprep.subr.mxu0 0.0
  %489 = vmatpush1.msra.mxu0 %v466
  %490 = vmatprep.subr.mxu0 0.0
  %491 = vmatpush1.msra.mxu0 %v467
  %492 = vmatprep.subr.mxu0 0.0
  %493 = vmatpush1.msra.mxu0 %v468
  %494 = vmatprep.subr.mxu0 0.0
  %495 = vmatpush1.msra.mxu0 %v469
  %496 = vmatprep.subr.mxu0 0.0
  %497 = vmatpush1.msra.mxu0 %v470
  %498 = vmatprep.subr.mxu0 0.0
  %499 = vmatpush1.msra.mxu0 %v471
  %500 = vmatprep.subr.mxu0 0.0
  %501 = vmatpush1.msra.mxu0 0.0
  %502 = vmatprep.subr.mxu0 0.0
  %503 = vmatpush1.msra.mxu0 0.0
  %504 = vmatprep.subr.mxu0 0.0
  %505 = vmatpush1.msra.mxu0 0.0
  %506 = vmatprep.subr.mxu0 0.0
  %507 = vmatpush1.msra.mxu0 0.0
  %508 = vmatprep.subr.mxu0 0.0
  %509 = vmatpush1.msra.mxu0 0.0
  %510 = vmatprep.subr.mxu0 0.0
  %511 = vmatpush1.msra.mxu0 0.0
  %512 = vmatprep.subr.mxu0 0.0
  %513 = vmatpush1.msra.mxu0 0.0
  %514 = vmatprep.subr.mxu0 0.0
  %515 = vmatpush1.msra.mxu0 0.0
  %516 = vmatprep.subr.mxu0 0.0
  %517 = vmatpush1.msra.mxu0 0.0
  %518 = vmatprep.subr.mxu0 0.0
  %519 = vmatpush1.msra.mxu0 0.0
  %520 = vmatprep.subr.mxu0 0.0
  %521 = vmatpush1.msra.mxu0 0.0
  %522 = vmatprep.subr.mxu0 0.0
  %523 = vmatpush1.msra.mxu0 0.0
  %524 = vmatprep.subr.mxu0 0.0
  %525 = vmatpush1.msra.mxu0 0.0
  %526 = vmatprep.subr.mxu0 0.0
  %527 = vmatpush1.msra.mxu0 0.0
  %528 = vmatprep.subr.mxu0 0.0
  %529 = vmatpush1.msra.mxu0 0.0
  %530 = vmatprep.subr.mxu0 0.0
  %531 = vmatpush1.msra.mxu0 0.0
  %532 = vmatprep.subr.mxu0 0.0
  %533 = vmatpush1.msra.mxu0 0.0
  %534 = vmatprep.subr.mxu0 0.0
  %535 = vmatpush1.msra.mxu0 0.0
  %536 = vmatprep.subr.mxu0 0.0
  %537 = vmatpush1.msra.mxu0 0.0
  %538 = vmatprep.subr.mxu0 0.0
  %539 = vmatpush1.msra.mxu0 0.0
  %540 = vmatprep.subr.mxu0 0.0
  %541 = vmatpush1.msra.mxu0 0.0
  %542 = vmatprep.subr.mxu0 0.0
  %543 = vmatpush1.msra.mxu0 0.0
  %544 = vmatprep.subr.mxu0 0.0
  %545 = vmatpush1.msra.mxu0 0.0
  %546 = vmatprep.subr.mxu0 0.0
  %547 = vmatpush1.msra.mxu0 0.0
  %548 = vmatprep.mubr.f32.mxu0 0.0
  %549 = vmatmul.mubr.f32.gmra.mrb[0].mxu0 %v473
  %v550 = vpop.f32.mrb[0].mxu0
  %v551 = vadd.f32 0.0, %v550
  %v552 = vpop.f32.mrb[0].mxu0
  %553 = vmatprep.mubr.f32.mxu0 0.0
  %554 = vmatmul.mubr.f32.gmra.mrb[0].mxu0 %v476
  %v555 = vpop.f32.mrb[0].mxu0
  %v556 = vadd.f32 0.0, %v555
  %v557 = vpop.f32.mrb[0].mxu0
  %558 = vmatprep.mubr.f32.mxu0 0.0
  %559 = vmatmul.mubr.f32.gmra.mrb[0].mxu0 %v479
  %v560 = vpop.f32.mrb[0].mxu0
  %v561 = vadd.f32 0.0, %v560
  %v562 = vpop.f32.mrb[0].mxu0
  %563 = vmatprep.mubr.f32.mxu0 0.0
  %564 = vmatmul.mubr.f32.gmra.mrb[0].mxu0 %v482
  %v565 = vpop.f32.mrb[0].mxu0
  %v566 = vadd.f32 0.0, %v565
  %v567 = vpop.f32.mrb[0].mxu0
  %568 = vdwg.mxu0
  %v569 = vadd.f32 %v445, %v551
  %v570 = vadd.f32 %v450, %v556
  %v571 = vadd.f32 %v455, %v561
  %v572 = vadd.f32 %v460, %v566
  %v573 = vld [vmem:[%s5] sm:$0xff]
  %v574 = vld [vmem:[%s5 + $0x8] sm:$0xff]
  %v575 = vld [vmem:[%s5 + $0x10] sm:$0xff]
  %v576 = vld [vmem:[%s5 + $0x18] sm:$0xff]
  %v577 = vld [vmem:[%s5 + $0x20] sm:$0xff]
  %v578 = vld [vmem:[%s5 + $0x28] sm:$0xff]
  %v579 = vld [vmem:[%s5 + $0x30] sm:$0xff]
  %v580 = vld [vmem:[%s5 + $0x38] sm:$0xff]
  %v581 = vld [vmem:[%s5 + $0x40] sm:$0xff]
  %v582 = vld [vmem:[%s5 + $0x48] sm:$0xff]
  %v583 = vld [vmem:[%s5 + $0x50] sm:$0xff]
  %v584 = vld [vmem:[%s5 + $0x58] sm:$0xff]
  %v585 = vld [vmem:[%s5 + $0x60] sm:$0xff]
  %v586 = vld [vmem:[%s5 + $0x68] sm:$0xff]
  %v587 = vld [vmem:[%s5 + $0x70] sm:$0xff]
  %v588 = vld [vmem:[%s5 + $0x78] sm:$0xff]
  %v589 = vld [vmem:[%s6] sm:$0xff]
  %v590 = vld [vmem:[%s9] sm:$0x1]
  %v591 = vld [vmem:[%s10] sm:$0x1]
  %v592 = vadd.f32 %v569, %v570
  %v593 = vadd.f32 %v592, %v571
  %v594 = vadd.f32 %v593, %v572
  %v595 = vrot.slane %v594, 4
  %v596 = vadd.f32 %v594, %v595
  %v597 = vrot.slane %v596, 2
  %v598 = vadd.f32 %v596, %v597
  %v599 = vrot.slane %v598, 1
  %v600 = vadd.f32 %v598, %v599
  %v601 = vmul.f32 %v569, %v569
  %v602 = vmul.f32 %v570, %v570
  %v603 = vmul.f32 %v571, %v571
  %v604 = vmul.f32 %v572, %v572
  %v605 = vadd.f32 %v601, %v602
  %v606 = vadd.f32 %v605, %v603
  %v607 = vadd.f32 %v606, %v604
  %v608 = vrot.slane %v607, 4
  %v609 = vadd.f32 %v607, %v608
  %v610 = vrot.slane %v609, 2
  %v611 = vadd.f32 %v609, %v610
  %v612 = vrot.slane %v611, 1
  %v613 = vadd.f32 %v611, %v612
  %614 = vmatprep.subr.mxu0 0.0
  %615 = vmatpush1.msra.mxu0 %v573
  %616 = vmatprep.subr.mxu0 0.0
  %617 = vmatpush1.msra.mxu0 %v574
  %618 = vmatprep.subr.mxu0 0.0
  %619 = vmatpush1.msra.mxu0 %v575
  %620 = vmatprep.subr.mxu0 0.0
  %621 = vmatpush1.msra.mxu0 %v576
  %622 = vmatprep.subr.mxu0 0.0
  %623 = vmatpush1.msra.mxu0 %v577
  %624 = vmatprep.subr.mxu0 0.0
  %625 = vmatpush1.msra.mxu0 %v578
  %626 = vmatprep.subr.mxu0 0.0
  %627 = vmatpush1.msra.mxu0 %v579
  %628 = vmatprep.subr.mxu0 0.0
  %629 = vmatpush1.msra.mxu0 %v580
  %630 = vmatprep.subr.mxu0 0.0
  %631 = vmatpush1.msra.mxu0 %v581
  %632 = vmatprep.subr.mxu0 0.0
  %633 = vmatpush1.msra.mxu0 %v582
  %634 = vmatprep.subr.mxu0 0.0
  %635 = vmatpush1.msra.mxu0 %v583
  %636 = vmatprep.subr.mxu0 0.0
  %637 = vmatpush1.msra.mxu0 %v584
  %638 = vmatprep.subr.mxu0 0.0
  %639 = vmatpush1.msra.mxu0 %v585
  %640 = vmatprep.subr.mxu0 0.0
  %641 = vmatpush1.msra.mxu0 %v586
  %642 = vmatprep.subr.mxu0 0.0
  %643 = vmatpush1.msra.mxu0 %v587
  %644 = vmatprep.subr.mxu0 0.0
  %645 = vmatpush1.msra.mxu0 %v588
  %646 = vmatprep.subr.mxu0 0.0
  %647 = vmatpush1.msra.mxu0 0.0
  %648 = vmatprep.subr.mxu0 0.0
  %649 = vmatpush1.msra.mxu0 0.0
  %650 = vmatprep.subr.mxu0 0.0
  %651 = vmatpush1.msra.mxu0 0.0
  %652 = vmatprep.subr.mxu0 0.0
  %653 = vmatpush1.msra.mxu0 0.0
  %654 = vmatprep.subr.mxu0 0.0
  %655 = vmatpush1.msra.mxu0 0.0
  %656 = vmatprep.subr.mxu0 0.0
  %657 = vmatpush1.msra.mxu0 0.0
  %658 = vmatprep.subr.mxu0 0.0
  %659 = vmatpush1.msra.mxu0 0.0
  %660 = vmatprep.subr.mxu0 0.0
  %661 = vmatpush1.msra.mxu0 0.0
  %662 = vmatprep.subr.mxu0 0.0
  %663 = vmatpush1.msra.mxu0 0.0
  %664 = vmatprep.subr.mxu0 0.0
  %665 = vmatpush1.msra.mxu0 0.0
  %666 = vmatprep.subr.mxu0 0.0
  %667 = vmatpush1.msra.mxu0 0.0
  %668 = vmatprep.subr.mxu0 0.0
  %669 = vmatpush1.msra.mxu0 0.0
  %670 = vmatprep.subr.mxu0 0.0
  %671 = vmatpush1.msra.mxu0 0.0
  %672 = vmatprep.subr.mxu0 0.0
  %673 = vmatpush1.msra.mxu0 0.0
  %674 = vmatprep.subr.mxu0 0.0
  %675 = vmatpush1.msra.mxu0 0.0
  %676 = vmatprep.subr.mxu0 0.0
  %677 = vmatpush1.msra.mxu0 0.0
  %678 = vmatprep.mubr.f32.mxu0 0.0
  %679 = vmatmul.mubr.f32.gmra.mrb[0].mxu0 %v600
  %v680 = vpop.f32.mrb[0].mxu0
  %v681 = vadd.f32 0.0, %v680
  %v682 = vpop.f32.mrb[0].mxu0
  %683 = vdwg.mxu0
  %v684 = vmul.f32 %v681, 0.001953125
  %685 = vmatprep.subr.mxu0 0.0
  %686 = vmatpush1.msra.mxu0 %v573
  %687 = vmatprep.subr.mxu0 0.0
  %688 = vmatpush1.msra.mxu0 %v574
  %689 = vmatprep.subr.mxu0 0.0
  %690 = vmatpush1.msra.mxu0 %v575
  %691 = vmatprep.subr.mxu0 0.0
  %692 = vmatpush1.msra.mxu0 %v576
  %693 = vmatprep.subr.mxu0 0.0
  %694 = vmatpush1.msra.mxu0 %v577
  %695 = vmatprep.subr.mxu0 0.0
  %696 = vmatpush1.msra.mxu0 %v578
  %697 = vmatprep.subr.mxu0 0.0
  %698 = vmatpush1.msra.mxu0 %v579
  %699 = vmatprep.subr.mxu0 0.0
  %700 = vmatpush1.msra.mxu0 %v580
  %701 = vmatprep.subr.mxu0 0.0
  %702 = vmatpush1.msra.mxu0 %v581
  %703 = vmatprep.subr.mxu0 0.0
  %704 = vmatpush1.msra.mxu0 %v582
  %705 = vmatprep.subr.mxu0 0.0
  %706 = vmatpush1.msra.mxu0 %v583
  %707 = vmatprep.subr.mxu0 0.0
  %708 = vmatpush1.msra.mxu0 %v584
  %709 = vmatprep.subr.mxu0 0.0
  %710 = vmatpush1.msra.mxu0 %v585
  %711 = vmatprep.subr.mxu0 0.0
  %712 = vmatpush1.msra.mxu0 %v586
  %713 = vmatprep.subr.mxu0 0.0
  %714 = vmatpush1.msra.mxu0 %v587
  %715 = vmatprep.subr.mxu0 0.0
  %716 = vmatpush1.msra.mxu0 %v588
  %717 = vmatprep.subr.mxu0 0.0
  %718 = vmatpush1.msra.mxu0 0.0
  %719 = vmatprep.subr.mxu0 0.0
  %720 = vmatpush1.msra.mxu0 0.0
  %721 = vmatprep.subr.mxu0 0.0
  %722 = vmatpush1.msra.mxu0 0.0
  %723 = vmatprep.subr.mxu0 0.0
  %724 = vmatpush1.msra.mxu0 0.0
  %725 = vmatprep.subr.mxu0 0.0
  %726 = vmatpush1.msra.mxu0 0.0
  %727 = vmatprep.subr.mxu0 0.0
  %728 = vmatpush1.msra.mxu0 0.0
  %729 = vmatprep.subr.mxu0 0.0
  %730 = vmatpush1.msra.mxu0 0.0
  %731 = vmatprep.subr.mxu0 0.0
  %732 = vmatpush1.msra.mxu0 0.0
  %733 = vmatprep.subr.mxu0 0.0
  %734 = vmatpush1.msra.mxu0 0.0
  %735 = vmatprep.subr.mxu0 0.0
  %736 = vmatpush1.msra.mxu0 0.0
  %737 = vmatprep.subr.mxu0 0.0
  %738 = vmatpush1.msra.mxu0 0.0
  %739 = vmatprep.subr.mxu0 0.0
  %740 = vmatpush1.msra.mxu0 0.0
  %741 = vmatprep.subr.mxu0 0.0
  %742 = vmatpush1.msra.mxu0 0.0
  %743 = vmatprep.subr.mxu0 0.0
  %744 = vmatpush1.msra.mxu0 0.0
  %745 = vmatprep.subr.mxu0 0.0
  %746 = vmatpush1.msra.mxu0 0.0
  %747 = vmatprep.subr.mxu0 0.0
  %748 = vmatpush1.msra.mxu0 0.0
  %749 = vmatprep.mubr.f32.mxu0 0.0
  %750 = vmatmul.mubr.f32.gmra.mrb[0].mxu0 %v613
  %v751 = vpop.f32.mrb[0].mxu0
  %v752 = vadd.f32 0.0, %v751
  %v753 = vpop.f32.mrb[0].mxu0
  %754 = vdwg.mxu0
  %v755 = vmul.f32 %v752, 0.001953125
  %v756 = vmul.f32 %v684, %v684
  %v757 = vsub.f32 %v755, %v756
  %v758 = vadd.f32 %v757, 1e-05
  %v759 = vrsqrt.pop %v758
  %v760 = vmul.f32 %v590, %v759
  %v761 = vmul.f32 %v684, %v760
  %v762 = vsub.f32 %v591, %v761
  %vm763 = vcmask 64512
  %v765 = vsel %vm763, %v760, 0
  %767 = vmatprep.subr.mxu0 0.0
  %768 = vmatpush1.msra.mxu0 %v589
  %769 = vmatprep.subr.mxu0 0.0
  %770 = vmatpush1.msra.mxu0 0.0
  %771 = vmatprep.subr.mxu0 0.0
  %772 = vmatpush1.msra.mxu0 0.0
  %773 = vmatprep.subr.mxu0 0.0
  %774 = vmatpush1.msra.mxu0 0.0
  %775 = vmatprep.subr.mxu0 0.0
  %776 = vmatpush1.msra.mxu0 0.0
  %777 = vmatprep.subr.mxu0 0.0
  %778 = vmatpush1.msra.mxu0 0.0
  %779 = vmatprep.subr.mxu0 0.0
  %780 = vmatpush1.msra.mxu0 0.0
  %781 = vmatprep.subr.mxu0 0.0
  %782 = vmatpush1.msra.mxu0 0.0
  %783 = vmatprep.subr.mxu0 0.0
  %784 = vmatpush1.msra.mxu0 0.0
  %785 = vmatprep.subr.mxu0 0.0
  %786 = vmatpush1.msra.mxu0 0.0
  %787 = vmatprep.subr.mxu0 0.0
  %788 = vmatpush1.msra.mxu0 0.0
  %789 = vmatprep.subr.mxu0 0.0
  %790 = vmatpush1.msra.mxu0 0.0
  %791 = vmatprep.subr.mxu0 0.0
  %792 = vmatpush1.msra.mxu0 0.0
  %793 = vmatprep.subr.mxu0 0.0
  %794 = vmatpush1.msra.mxu0 0.0
  %795 = vmatprep.subr.mxu0 0.0
  %796 = vmatpush1.msra.mxu0 0.0
  %797 = vmatprep.subr.mxu0 0.0
  %798 = vmatpush1.msra.mxu0 0.0
  %799 = vmatprep.subr.mxu0 0.0
  %800 = vmatpush1.msra.mxu0 0.0
  %801 = vmatprep.subr.mxu0 0.0
  %802 = vmatpush1.msra.mxu0 0.0
  %803 = vmatprep.subr.mxu0 0.0
  %804 = vmatpush1.msra.mxu0 0.0
  %805 = vmatprep.subr.mxu0 0.0
  %806 = vmatpush1.msra.mxu0 0.0
  %807 = vmatprep.subr.mxu0 0.0
  %808 = vmatpush1.msra.mxu0 0.0
  %809 = vmatprep.subr.mxu0 0.0
  %810 = vmatpush1.msra.mxu0 0.0
  %811 = vmatprep.subr.mxu0 0.0
  %812 = vmatpush1.msra.mxu0 0.0
  %813 = vmatprep.subr.mxu0 0.0
  %814 = vmatpush1.msra.mxu0 0.0
  %815 = vmatprep.subr.mxu0 0.0
  %816 = vmatpush1.msra.mxu0 0.0
  %817 = vmatprep.subr.mxu0 0.0
  %818 = vmatpush1.msra.mxu0 0.0
  %819 = vmatprep.subr.mxu0 0.0
  %820 = vmatpush1.msra.mxu0 0.0
  %821 = vmatprep.subr.mxu0 0.0
  %822 = vmatpush1.msra.mxu0 0.0
  %823 = vmatprep.subr.mxu0 0.0
  %824 = vmatpush1.msra.mxu0 0.0
  %825 = vmatprep.subr.mxu0 0.0
  %826 = vmatpush1.msra.mxu0 0.0
  %827 = vmatprep.subr.mxu0 0.0
  %828 = vmatpush1.msra.mxu0 0.0
  %829 = vmatprep.subr.mxu0 0.0
  %830 = vmatpush1.msra.mxu0 0.0
  %831 = vmatprep.mubr.f32.mxu0 0.0
  %832 = vmatmul.mubr.f32.gmra.mrb[0].mxu0 %v765
  %v833 = vpop.f32.mrb[0].mxu0
  %v834 = vadd.f32 0.0, %v833
  %v835 = vpop.f32.mrb[0].mxu0
  %836 = vdwg.mxu0
  %v838 = vsel %vm763, %v762, 0
  %840 = vmatprep.subr.mxu0 0.0
  %841 = vmatpush1.msra.mxu0 %v589
  %842 = vmatprep.subr.mxu0 0.0
  %843 = vmatpush1.msra.mxu0 0.0
  %844 = vmatprep.subr.mxu0 0.0
  %845 = vmatpush1.msra.mxu0 0.0
  %846 = vmatprep.subr.mxu0 0.0
  %847 = vmatpush1.msra.mxu0 0.0
  %848 = vmatprep.subr.mxu0 0.0
  %849 = vmatpush1.msra.mxu0 0.0
  %850 = vmatprep.subr.mxu0 0.0
  %851 = vmatpush1.msra.mxu0 0.0
  %852 = vmatprep.subr.mxu0 0.0
  %853 = vmatpush1.msra.mxu0 0.0
  %854 = vmatprep.subr.mxu0 0.0
  %855 = vmatpush1.msra.mxu0 0.0
  %856 = vmatprep.subr.mxu0 0.0
  %857 = vmatpush1.msra.mxu0 0.0
  %858 = vmatprep.subr.mxu0 0.0
  %859 = vmatpush1.msra.mxu0 0.0
  %860 = vmatprep.subr.mxu0 0.0
  %861 = vmatpush1.msra.mxu0 0.0
  %862 = vmatprep.subr.mxu0 0.0
  %863 = vmatpush1.msra.mxu0 0.0
  %864 = vmatprep.subr.mxu0 0.0
  %865 = vmatpush1.msra.mxu0 0.0
  %866 = vmatprep.subr.mxu0 0.0
  %867 = vmatpush1.msra.mxu0 0.0
  %868 = vmatprep.subr.mxu0 0.0
  %869 = vmatpush1.msra.mxu0 0.0
  %870 = vmatprep.subr.mxu0 0.0
  %871 = vmatpush1.msra.mxu0 0.0
  %872 = vmatprep.subr.mxu0 0.0
  %873 = vmatpush1.msra.mxu0 0.0
  %874 = vmatprep.subr.mxu0 0.0
  %875 = vmatpush1.msra.mxu0 0.0
  %876 = vmatprep.subr.mxu0 0.0
  %877 = vmatpush1.msra.mxu0 0.0
  %878 = vmatprep.subr.mxu0 0.0
  %879 = vmatpush1.msra.mxu0 0.0
  %880 = vmatprep.subr.mxu0 0.0
  %881 = vmatpush1.msra.mxu0 0.0
  %882 = vmatprep.subr.mxu0 0.0
  %883 = vmatpush1.msra.mxu0 0.0
  %884 = vmatprep.subr.mxu0 0.0
  %885 = vmatpush1.msra.mxu0 0.0
  %886 = vmatprep.subr.mxu0 0.0
  %887 = vmatpush1.msra.mxu0 0.0
  %888 = vmatprep.subr.mxu0 0.0
  %889 = vmatpush1.msra.mxu0 0.0
  %890 = vmatprep.subr.mxu0 0.0
  %891 = vmatpush1.msra.mxu0 0.0
  %892 = vmatprep.subr.mxu0 0.0
  %893 = vmatpush1.msra.mxu0 0.0
  %894 = vmatprep.subr.mxu0 0.0
  %895 = vmatpush1.msra.mxu0 0.0
  %896 = vmatprep.subr.mxu0 0.0
  %897 = vmatpush1.msra.mxu0 0.0
  %898 = vmatprep.subr.mxu0 0.0
  %899 = vmatpush1.msra.mxu0 0.0
  %900 = vmatprep.subr.mxu0 0.0
  %901 = vmatpush1.msra.mxu0 0.0
  %902 = vmatprep.subr.mxu0 0.0
  %903 = vmatpush1.msra.mxu0 0.0
  %904 = vmatprep.mubr.f32.mxu0 0.0
  %905 = vmatmul.mubr.f32.gmra.mrb[0].mxu0 %v838
  %v906 = vpop.f32.mrb[0].mxu0
  %v907 = vadd.f32 0.0, %v906
  %v908 = vpop.f32.mrb[0].mxu0
  %909 = vdwg.mxu0
  %v910 = vlaneseq
  %v911 = vshrl.u32 %v910, 7
  %v912 = vsub.s32 0, %v911
  %v913 = vrot.slane %v834, %v912
  %v914 = vmul.f32 %v569, %v913
  %v915 = vmul.f32 %v570, %v913
  %v916 = vmul.f32 %v571, %v913
  %v917 = vmul.f32 %v572, %v913
  %v918 = vlaneseq
  %v919 = vshrl.u32 %v918, 7
  %v920 = vsub.s32 0, %v919
  %v921 = vrot.slane %v907, %v920
  %v922 = vadd.f32 %v914, %v921
  %v923 = vadd.f32 %v915, %v921
  %v924 = vadd.f32 %v916, %v921
  %v925 = vadd.f32 %v917, %v921
  %v926 = vmax.f32 %v922, 0.0
  %v927 = vmax.f32 %v923, 0.0
  %v928 = vmax.f32 %v924, 0.0
  %v929 = vmax.f32 %v925, 0.0
  %930 = vmatprep.subr.mxu0 0.0
  %931 = vmatpush1.msra.mxu0 %v926
  %932 = vmatprep.subr.mxu0 0.0
  %933 = vmatpush1.msra.mxu0 %v927
  %934 = vmatprep.subr.mxu0 0.0
  %935 = vmatpush1.msra.mxu0 %v928
  %936 = vmatprep.subr.mxu0 0.0
  %937 = vmatpush1.msra.mxu0 %v929
  %938 = vmatprep.subr.mxu0 0.0
  %939 = vmatpush1.msra.mxu0 0.0
  %940 = vmatprep.subr.mxu0 0.0
  %941 = vmatpush1.msra.mxu0 0.0
  %942 = vmatprep.subr.mxu0 0.0
  %943 = vmatpush1.msra.mxu0 0.0
  %944 = vmatprep.subr.mxu0 0.0
  %945 = vmatpush1.msra.mxu0 0.0
  %946 = vmatprep.subr.mxu0 0.0
  %947 = vmatpush1.msra.mxu0 0.0
  %948 = vmatprep.subr.mxu0 0.0
  %949 = vmatpush1.msra.mxu0 0.0
  %950 = vmatprep.subr.mxu0 0.0
  %951 = vmatpush1.msra.mxu0 0.0
  %952 = vmatprep.subr.mxu0 0.0
  %953 = vmatpush1.msra.mxu0 0.0
  %954 = vmatprep.subr.mxu0 0.0
  %955 = vmatpush1.msra.mxu0 0.0
  %956 = vmatprep.subr.mxu0 0.0
  %957 = vmatpush1.msra.mxu0 0.0
  %958 = vmatprep.subr.mxu0 0.0
  %959 = vmatpush1.msra.mxu0 0.0
  %960 = vmatprep.subr.mxu0 0.0
  %961 = vmatpush1.msra.mxu0 0.0
  %962 = vmatprep.subr.mxu0 0.0
  %963 = vmatpush1.msra.mxu0 0.0
  %964 = vmatprep.subr.mxu0 0.0
  %965 = vmatpush1.msra.mxu0 0.0
  %966 = vmatprep.subr.mxu0 0.0
  %967 = vmatpush1.msra.mxu0 0.0
  %968 = vmatprep.subr.mxu0 0.0
  %969 = vmatpush1.msra.mxu0 0.0
  %970 = vmatprep.subr.mxu0 0.0
  %971 = vmatpush1.msra.mxu0 0.0
  %972 = vmatprep.subr.mxu0 0.0
  %973 = vmatpush1.msra.mxu0 0.0
  %974 = vmatprep.subr.mxu0 0.0
  %975 = vmatpush1.msra.mxu0 0.0
  %976 = vmatprep.subr.mxu0 0.0
  %977 = vmatpush1.msra.mxu0 0.0
  %978 = vmatprep.subr.mxu0 0.0
  %979 = vmatpush1.msra.mxu0 0.0
  %980 = vmatprep.subr.mxu0 0.0
  %981 = vmatpush1.msra.mxu0 0.0
  %982 = vmatprep.subr.mxu0 0.0
  %983 = vmatpush1.msra.mxu0 0.0
  %984 = vmatprep.subr.mxu0 0.0
  %985 = vmatpush1.msra.mxu0 0.0
  %986 = vmatprep.subr.mxu0 0.0
  %987 = vmatpush1.msra.mxu0 0.0
  %988 = vmatprep.subr.mxu0 0.0
  %989 = vmatpush1.msra.mxu0 0.0
  %990 = vmatprep.subr.mxu0 0.0
  %991 = vmatpush1.msra.mxu0 0.0
  %992 = vmatprep.subr.mxu0 0.0
  %993 = vmatpush1.msra.mxu0 0.0
  %994 = vmatprep.mubr.f32.mxu0 0.0
  %995 = vmatmul.mubr.f32.gmra.mrb[0].mxu0 %v58
  %v996 = vpop.f32.mrb[0].mxu0
  %v997 = vadd.f32 0.0, %v996
  %v998 = vpop.f32.mrb[0].mxu0
  %999 = vmatprep.mubr.f32.mxu0 0.0
  %1000 = vmatmul.mubr.f32.gmra.mrb[0].mxu0 %v61
  %v1001 = vpop.f32.mrb[0].mxu0
  %v1002 = vadd.f32 0.0, %v1001
  %v1003 = vpop.f32.mrb[0].mxu0
  %1004 = vmatprep.mubr.f32.mxu0 0.0
  %1005 = vmatmul.mubr.f32.gmra.mrb[0].mxu0 %v64
  %v1006 = vpop.f32.mrb[0].mxu0
  %v1007 = vadd.f32 0.0, %v1006
  %v1008 = vpop.f32.mrb[0].mxu0
  %1009 = vmatprep.mubr.f32.mxu0 0.0
  %1010 = vmatmul.mubr.f32.gmra.mrb[0].mxu0 %v67
  %v1011 = vpop.f32.mrb[0].mxu0
  %v1012 = vadd.f32 0.0, %v1011
  %v1013 = vpop.f32.mrb[0].mxu0
  %1014 = vdwg.mxu0
  %1015 = vmatprep.subr.mxu0 0.0
  %1016 = vmatpush1.msra.mxu0 %v926
  %1017 = vmatprep.subr.mxu0 0.0
  %1018 = vmatpush1.msra.mxu0 %v927
  %1019 = vmatprep.subr.mxu0 0.0
  %1020 = vmatpush1.msra.mxu0 %v928
  %1021 = vmatprep.subr.mxu0 0.0
  %1022 = vmatpush1.msra.mxu0 %v929
  %1023 = vmatprep.subr.mxu0 0.0
  %1024 = vmatpush1.msra.mxu0 0.0
  %1025 = vmatprep.subr.mxu0 0.0
  %1026 = vmatpush1.msra.mxu0 0.0
  %1027 = vmatprep.subr.mxu0 0.0
  %1028 = vmatpush1.msra.mxu0 0.0
  %1029 = vmatprep.subr.mxu0 0.0
  %1030 = vmatpush1.msra.mxu0 0.0
  %1031 = vmatprep.subr.mxu0 0.0
  %1032 = vmatpush1.msra.mxu0 0.0
  %1033 = vmatprep.subr.mxu0 0.0
  %1034 = vmatpush1.msra.mxu0 0.0
  %1035 = vmatprep.subr.mxu0 0.0
  %1036 = vmatpush1.msra.mxu0 0.0
  %1037 = vmatprep.subr.mxu0 0.0
  %1038 = vmatpush1.msra.mxu0 0.0
  %1039 = vmatprep.subr.mxu0 0.0
  %1040 = vmatpush1.msra.mxu0 0.0
  %1041 = vmatprep.subr.mxu0 0.0
  %1042 = vmatpush1.msra.mxu0 0.0
  %1043 = vmatprep.subr.mxu0 0.0
  %1044 = vmatpush1.msra.mxu0 0.0
  %1045 = vmatprep.subr.mxu0 0.0
  %1046 = vmatpush1.msra.mxu0 0.0
  %1047 = vmatprep.subr.mxu0 0.0
  %1048 = vmatpush1.msra.mxu0 0.0
  %1049 = vmatprep.subr.mxu0 0.0
  %1050 = vmatpush1.msra.mxu0 0.0
  %1051 = vmatprep.subr.mxu0 0.0
  %1052 = vmatpush1.msra.mxu0 0.0
  %1053 = vmatprep.subr.mxu0 0.0
  %1054 = vmatpush1.msra.mxu0 0.0
  %1055 = vmatprep.subr.mxu0 0.0
  %1056 = vmatpush1.msra.mxu0 0.0
  %1057 = vmatprep.subr.mxu0 0.0
  %1058 = vmatpush1.msra.mxu0 0.0
  %1059 = vmatprep.subr.mxu0 0.0
  %1060 = vmatpush1.msra.mxu0 0.0
  %1061 = vmatprep.subr.mxu0 0.0
  %1062 = vmatpush1.msra.mxu0 0.0
  %1063 = vmatprep.subr.mxu0 0.0
  %1064 = vmatpush1.msra.mxu0 0.0
  %1065 = vmatprep.subr.mxu0 0.0
  %1066 = vmatpush1.msra.mxu0 0.0
  %1067 = vmatprep.subr.mxu0 0.0
  %1068 = vmatpush1.msra.mxu0 0.0
  %1069 = vmatprep.subr.mxu0 0.0
  %1070 = vmatpush1.msra.mxu0 0.0
  %1071 = vmatprep.subr.mxu0 0.0
  %1072 = vmatpush1.msra.mxu0 0.0
  %1073 = vmatprep.subr.mxu0 0.0
  %1074 = vmatpush1.msra.mxu0 0.0
  %1075 = vmatprep.subr.mxu0 0.0
  %1076 = vmatpush1.msra.mxu0 0.0
  %1077 = vmatprep.subr.mxu0 0.0
  %1078 = vmatpush1.msra.mxu0 0.0
  %1079 = vmatprep.mubr.f32.mxu0 0.0
  %1080 = vmatmul.mubr.f32.gmra.mrb[0].mxu0 %v155
  %v1081 = vpop.f32.mrb[0].mxu0
  %v1082 = vadd.f32 0.0, %v1081
  %v1083 = vpop.f32.mrb[0].mxu0
  %1084 = vmatprep.mubr.f32.mxu0 0.0
  %1085 = vmatmul.mubr.f32.gmra.mrb[0].mxu0 %v158
  %v1086 = vpop.f32.mrb[0].mxu0
  %v1087 = vadd.f32 0.0, %v1086
  %v1088 = vpop.f32.mrb[0].mxu0
  %1089 = vmatprep.mubr.f32.mxu0 0.0
  %1090 = vmatmul.mubr.f32.gmra.mrb[0].mxu0 %v161
  %v1091 = vpop.f32.mrb[0].mxu0
  %v1092 = vadd.f32 0.0, %v1091
  %v1093 = vpop.f32.mrb[0].mxu0
  %1094 = vmatprep.mubr.f32.mxu0 0.0
  %1095 = vmatmul.mubr.f32.gmra.mrb[0].mxu0 %v164
  %v1096 = vpop.f32.mrb[0].mxu0
  %v1097 = vadd.f32 0.0, %v1096
  %v1098 = vpop.f32.mrb[0].mxu0
  %1099 = vdwg.mxu0
  %v1100 = vld [vmem:[%s2] sm:$0xff]
  %v1101 = vld [vmem:[%s2 + $0x8] sm:$0xff]
  %v1102 = vld [vmem:[%s2 + $0x10] sm:$0xff]
  %v1103 = vld [vmem:[%s2 + $0x18] sm:$0xff]
  %v1104 = vld [vmem:[%s2 + $0x20] sm:$0xff]
  %v1105 = vld [vmem:[%s2 + $0x28] sm:$0xff]
  %v1106 = vld [vmem:[%s2 + $0x30] sm:$0xff]
  %v1107 = vld [vmem:[%s2 + $0x38] sm:$0xff]
  %v1108 = vld [vmem:[%s2 + $0x40] sm:$0xff]
  %v1109 = vld [vmem:[%s2 + $0x48] sm:$0xff]
  %v1110 = vld [vmem:[%s2 + $0x50] sm:$0xff]
  %v1111 = vld [vmem:[%s2 + $0x58] sm:$0xff]
  %v1112 = vld [vmem:[%s2 + $0x60] sm:$0xff]
  %v1113 = vld [vmem:[%s2 + $0x68] sm:$0xff]
  %v1114 = vld [vmem:[%s2 + $0x70] sm:$0xff]
  %v1115 = vld [vmem:[%s2 + $0x78] sm:$0xff]
  %s1116 = scalar_lea.vmem %s2, 128
  %v1117 = vld [vmem:[%s1116] sm:$0xff]
  %v1118 = vld [vmem:[%s1116 + $0x8] sm:$0xff]
  %v1119 = vld [vmem:[%s1116 + $0x10] sm:$0xff]
  %v1120 = vld [vmem:[%s1116 + $0x18] sm:$0xff]
  %v1121 = vld [vmem:[%s1116 + $0x20] sm:$0xff]
  %v1122 = vld [vmem:[%s1116 + $0x28] sm:$0xff]
  %v1123 = vld [vmem:[%s1116 + $0x30] sm:$0xff]
  %v1124 = vld [vmem:[%s1116 + $0x38] sm:$0xff]
  %v1125 = vld [vmem:[%s1116 + $0x40] sm:$0xff]
  %v1126 = vld [vmem:[%s1116 + $0x48] sm:$0xff]
  %v1127 = vld [vmem:[%s1116 + $0x50] sm:$0xff]
  %v1128 = vld [vmem:[%s1116 + $0x58] sm:$0xff]
  %v1129 = vld [vmem:[%s1116 + $0x60] sm:$0xff]
  %v1130 = vld [vmem:[%s1116 + $0x68] sm:$0xff]
  %v1131 = vld [vmem:[%s1116 + $0x70] sm:$0xff]
  %v1132 = vld [vmem:[%s1116 + $0x78] sm:$0xff]
  %1133 = vmatprep.subr.mxu0 0.0
  %1134 = vmatpush1.msra.mxu0 %v1117
  %1135 = vmatprep.subr.mxu0 0.0
  %1136 = vmatpush1.msra.mxu0 %v1118
  %1137 = vmatprep.subr.mxu0 0.0
  %1138 = vmatpush1.msra.mxu0 %v1119
  %1139 = vmatprep.subr.mxu0 0.0
  %1140 = vmatpush1.msra.mxu0 %v1120
  %1141 = vmatprep.subr.mxu0 0.0
  %1142 = vmatpush1.msra.mxu0 %v1121
  %1143 = vmatprep.subr.mxu0 0.0
  %1144 = vmatpush1.msra.mxu0 %v1122
  %1145 = vmatprep.subr.mxu0 0.0
  %1146 = vmatpush1.msra.mxu0 %v1123
  %1147 = vmatprep.subr.mxu0 0.0
  %1148 = vmatpush1.msra.mxu0 %v1124
  %1149 = vmatprep.subr.mxu0 0.0
  %1150 = vmatpush1.msra.mxu0 %v1125
  %1151 = vmatprep.subr.mxu0 0.0
  %1152 = vmatpush1.msra.mxu0 %v1126
  %1153 = vmatprep.subr.mxu0 0.0
  %1154 = vmatpush1.msra.mxu0 %v1127
  %1155 = vmatprep.subr.mxu0 0.0
  %1156 = vmatpush1.msra.mxu0 %v1128
  %1157 = vmatprep.subr.mxu0 0.0
  %1158 = vmatpush1.msra.mxu0 %v1129
  %1159 = vmatprep.subr.mxu0 0.0
  %1160 = vmatpush1.msra.mxu0 %v1130
  %1161 = vmatprep.subr.mxu0 0.0
  %1162 = vmatpush1.msra.mxu0 %v1131
  %1163 = vmatprep.subr.mxu0 0.0
  %1164 = vmatpush1.msra.mxu0 %v1132
  %1165 = vmatprep.subr.mxu0 0.0
  %1166 = vmatpush1.msra.mxu0 0.0
  %1167 = vmatprep.subr.mxu0 0.0
  %1168 = vmatpush1.msra.mxu0 0.0
  %1169 = vmatprep.subr.mxu0 0.0
  %1170 = vmatpush1.msra.mxu0 0.0
  %1171 = vmatprep.subr.mxu0 0.0
  %1172 = vmatpush1.msra.mxu0 0.0
  %1173 = vmatprep.subr.mxu0 0.0
  %1174 = vmatpush1.msra.mxu0 0.0
  %1175 = vmatprep.subr.mxu0 0.0
  %1176 = vmatpush1.msra.mxu0 0.0
  %1177 = vmatprep.subr.mxu0 0.0
  %1178 = vmatpush1.msra.mxu0 0.0
  %1179 = vmatprep.subr.mxu0 0.0
  %1180 = vmatpush1.msra.mxu0 0.0
  %1181 = vmatprep.subr.mxu0 0.0
  %1182 = vmatpush1.msra.mxu0 0.0
  %1183 = vmatprep.subr.mxu0 0.0
  %1184 = vmatpush1.msra.mxu0 0.0
  %1185 = vmatprep.subr.mxu0 0.0
  %1186 = vmatpush1.msra.mxu0 0.0
  %1187 = vmatprep.subr.mxu0 0.0
  %1188 = vmatpush1.msra.mxu0 0.0
  %1189 = vmatprep.subr.mxu0 0.0
  %1190 = vmatpush1.msra.mxu0 0.0
  %1191 = vmatprep.subr.mxu0 0.0
  %1192 = vmatpush1.msra.mxu0 0.0
  %1193 = vmatprep.subr.mxu0 0.0
  %1194 = vmatpush1.msra.mxu0 0.0
  %1195 = vmatprep.subr.mxu0 0.0
  %1196 = vmatpush1.msra.mxu0 0.0
  %1197 = vmatprep.mubr.f32.mxu0 0.0
  %1198 = vmatmul.mubr.f32.gmra.mrb[0].mxu0 %v926
  %v1199 = vpop.f32.mrb[0].mxu0
  %v1200 = vadd.f32 0.0, %v1199
  %v1201 = vpop.f32.mrb[0].mxu0
  %1202 = vmatprep.mubr.f32.mxu0 0.0
  %1203 = vmatmul.mubr.f32.gmra.mrb[0].mxu0 %v927
  %v1204 = vpop.f32.mrb[0].mxu0
  %v1205 = vadd.f32 0.0, %v1204
  %v1206 = vpop.f32.mrb[0].mxu0
  %1207 = vmatprep.mubr.f32.mxu0 0.0
  %1208 = vmatmul.mubr.f32.gmra.mrb[0].mxu0 %v928
  %v1209 = vpop.f32.mrb[0].mxu0
  %v1210 = vadd.f32 0.0, %v1209
  %v1211 = vpop.f32.mrb[0].mxu0
  %1212 = vmatprep.mubr.f32.mxu0 0.0
  %1213 = vmatmul.mubr.f32.gmra.mrb[0].mxu0 %v929
  %v1214 = vpop.f32.mrb[0].mxu0
  %v1215 = vadd.f32 0.0, %v1214
  %v1216 = vpop.f32.mrb[0].mxu0
  %1217 = vdwg.mxu0
  %1218 = vmatprep.subr.mxu0 0.0
  %1219 = vmatpush1.msra.mxu0 %v1100
  %1220 = vmatprep.subr.mxu0 0.0
  %1221 = vmatpush1.msra.mxu0 %v1101
  %1222 = vmatprep.subr.mxu0 0.0
  %1223 = vmatpush1.msra.mxu0 %v1102
  %1224 = vmatprep.subr.mxu0 0.0
  %1225 = vmatpush1.msra.mxu0 %v1103
  %1226 = vmatprep.subr.mxu0 0.0
  %1227 = vmatpush1.msra.mxu0 %v1104
  %1228 = vmatprep.subr.mxu0 0.0
  %1229 = vmatpush1.msra.mxu0 %v1105
  %1230 = vmatprep.subr.mxu0 0.0
  %1231 = vmatpush1.msra.mxu0 %v1106
  %1232 = vmatprep.subr.mxu0 0.0
  %1233 = vmatpush1.msra.mxu0 %v1107
  %1234 = vmatprep.subr.mxu0 0.0
  %1235 = vmatpush1.msra.mxu0 %v1108
  %1236 = vmatprep.subr.mxu0 0.0
  %1237 = vmatpush1.msra.mxu0 %v1109
  %1238 = vmatprep.subr.mxu0 0.0
  %1239 = vmatpush1.msra.mxu0 %v1110
  %1240 = vmatprep.subr.mxu0 0.0
  %1241 = vmatpush1.msra.mxu0 %v1111
  %1242 = vmatprep.subr.mxu0 0.0
  %1243 = vmatpush1.msra.mxu0 %v1112
  %1244 = vmatprep.subr.mxu0 0.0
  %1245 = vmatpush1.msra.mxu0 %v1113
  %1246 = vmatprep.subr.mxu0 0.0
  %1247 = vmatpush1.msra.mxu0 %v1114
  %1248 = vmatprep.subr.mxu0 0.0
  %1249 = vmatpush1.msra.mxu0 %v1115
  %1250 = vmatprep.subr.mxu0 0.0
  %1251 = vmatpush1.msra.mxu0 0.0
  %1252 = vmatprep.subr.mxu0 0.0
  %1253 = vmatpush1.msra.mxu0 0.0
  %1254 = vmatprep.subr.mxu0 0.0
  %1255 = vmatpush1.msra.mxu0 0.0
  %1256 = vmatprep.subr.mxu0 0.0
  %1257 = vmatpush1.msra.mxu0 0.0
  %1258 = vmatprep.subr.mxu0 0.0
  %1259 = vmatpush1.msra.mxu0 0.0
  %1260 = vmatprep.subr.mxu0 0.0
  %1261 = vmatpush1.msra.mxu0 0.0
  %1262 = vmatprep.subr.mxu0 0.0
  %1263 = vmatpush1.msra.mxu0 0.0
  %1264 = vmatprep.subr.mxu0 0.0
  %1265 = vmatpush1.msra.mxu0 0.0
  %1266 = vmatprep.subr.mxu0 0.0
  %1267 = vmatpush1.msra.mxu0 0.0
  %1268 = vmatprep.subr.mxu0 0.0
  %1269 = vmatpush1.msra.mxu0 0.0
  %1270 = vmatprep.subr.mxu0 0.0
  %1271 = vmatpush1.msra.mxu0 0.0
  %1272 = vmatprep.subr.mxu0 0.0
  %1273 = vmatpush1.msra.mxu0 0.0
  %1274 = vmatprep.subr.mxu0 0.0
  %1275 = vmatpush1.msra.mxu0 0.0
  %1276 = vmatprep.subr.mxu0 0.0
  %1277 = vmatpush1.msra.mxu0 0.0
  %1278 = vmatprep.subr.mxu0 0.0
  %1279 = vmatpush1.msra.mxu0 0.0
  %1280 = vmatprep.subr.mxu0 0.0
  %1281 = vmatpush1.msra.mxu0 0.0
  %1282 = vmatprep.mubr.f32.mxu0 0.0
  %1283 = vmatmul.mubr.f32.gmra.mrb[0].mxu0 %v997
  %v1284 = vpop.f32.mrb[0].mxu0
  %v1285 = vadd.f32 %v1200, %v1284
  %v1286 = vpop.f32.mrb[0].mxu0
  %1287 = vmatprep.mubr.f32.mxu0 0.0
  %1288 = vmatmul.mubr.f32.gmra.mrb[0].mxu0 %v1002
  %v1289 = vpop.f32.mrb[0].mxu0
  %v1290 = vadd.f32 %v1205, %v1289
  %v1291 = vpop.f32.mrb[0].mxu0
  %1292 = vmatprep.mubr.f32.mxu0 0.0
  %1293 = vmatmul.mubr.f32.gmra.mrb[0].mxu0 %v1007
  %v1294 = vpop.f32.mrb[0].mxu0
  %v1295 = vadd.f32 %v1210, %v1294
  %v1296 = vpop.f32.mrb[0].mxu0
  %1297 = vmatprep.mubr.f32.mxu0 0.0
  %1298 = vmatmul.mubr.f32.gmra.mrb[0].mxu0 %v1012
  %v1299 = vpop.f32.mrb[0].mxu0
  %v1300 = vadd.f32 %v1215, %v1299
  %v1301 = vpop.f32.mrb[0].mxu0
  %1302 = vdwg.mxu0
  %s1303 = scalar_lea.vmem %s2, 256
  %v1304 = vld [vmem:[%s1303] sm:$0xff]
  %v1305 = vld [vmem:[%s1303 + $0x8] sm:$0xff]
  %v1306 = vld [vmem:[%s1303 + $0x10] sm:$0xff]
  %v1307 = vld [vmem:[%s1303 + $0x18] sm:$0xff]
  %v1308 = vld [vmem:[%s1303 + $0x20] sm:$0xff]
  %v1309 = vld [vmem:[%s1303 + $0x28] sm:$0xff]
  %v1310 = vld [vmem:[%s1303 + $0x30] sm:$0xff]
  %v1311 = vld [vmem:[%s1303 + $0x38] sm:$0xff]
  %v1312 = vld [vmem:[%s1303 + $0x40] sm:$0xff]
  %v1313 = vld [vmem:[%s1303 + $0x48] sm:$0xff]
  %v1314 = vld [vmem:[%s1303 + $0x50] sm:$0xff]
  %v1315 = vld [vmem:[%s1303 + $0x58] sm:$0xff]
  %v1316 = vld [vmem:[%s1303 + $0x60] sm:$0xff]
  %v1317 = vld [vmem:[%s1303 + $0x68] sm:$0xff]
  %v1318 = vld [vmem:[%s1303 + $0x70] sm:$0xff]
  %v1319 = vld [vmem:[%s1303 + $0x78] sm:$0xff]
  %1320 = vmatprep.subr.mxu0 0.0
  %1321 = vmatpush1.msra.mxu0 %v1304
  %1322 = vmatprep.subr.mxu0 0.0
  %1323 = vmatpush1.msra.mxu0 %v1305
  %1324 = vmatprep.subr.mxu0 0.0
  %1325 = vmatpush1.msra.mxu0 %v1306
  %1326 = vmatprep.subr.mxu0 0.0
  %1327 = vmatpush1.msra.mxu0 %v1307
  %1328 = vmatprep.subr.mxu0 0.0
  %1329 = vmatpush1.msra.mxu0 %v1308
  %1330 = vmatprep.subr.mxu0 0.0
  %1331 = vmatpush1.msra.mxu0 %v1309
  %1332 = vmatprep.subr.mxu0 0.0
  %1333 = vmatpush1.msra.mxu0 %v1310
  %1334 = vmatprep.subr.mxu0 0.0
  %1335 = vmatpush1.msra.mxu0 %v1311
  %1336 = vmatprep.subr.mxu0 0.0
  %1337 = vmatpush1.msra.mxu0 %v1312
  %1338 = vmatprep.subr.mxu0 0.0
  %1339 = vmatpush1.msra.mxu0 %v1313
  %1340 = vmatprep.subr.mxu0 0.0
  %1341 = vmatpush1.msra.mxu0 %v1314
  %1342 = vmatprep.subr.mxu0 0.0
  %1343 = vmatpush1.msra.mxu0 %v1315
  %1344 = vmatprep.subr.mxu0 0.0
  %1345 = vmatpush1.msra.mxu0 %v1316
  %1346 = vmatprep.subr.mxu0 0.0
  %1347 = vmatpush1.msra.mxu0 %v1317
  %1348 = vmatprep.subr.mxu0 0.0
  %1349 = vmatpush1.msra.mxu0 %v1318
  %1350 = vmatprep.subr.mxu0 0.0
  %1351 = vmatpush1.msra.mxu0 %v1319
  %1352 = vmatprep.subr.mxu0 0.0
  %1353 = vmatpush1.msra.mxu0 0.0
  %1354 = vmatprep.subr.mxu0 0.0
  %1355 = vmatpush1.msra.mxu0 0.0
  %1356 = vmatprep.subr.mxu0 0.0
  %1357 = vmatpush1.msra.mxu0 0.0
  %1358 = vmatprep.subr.mxu0 0.0
  %1359 = vmatpush1.msra.mxu0 0.0
  %1360 = vmatprep.subr.mxu0 0.0
  %1361 = vmatpush1.msra.mxu0 0.0
  %1362 = vmatprep.subr.mxu0 0.0
  %1363 = vmatpush1.msra.mxu0 0.0
  %1364 = vmatprep.subr.mxu0 0.0
  %1365 = vmatpush1.msra.mxu0 0.0
  %1366 = vmatprep.subr.mxu0 0.0
  %1367 = vmatpush1.msra.mxu0 0.0
  %1368 = vmatprep.subr.mxu0 0.0
  %1369 = vmatpush1.msra.mxu0 0.0
  %1370 = vmatprep.subr.mxu0 0.0
  %1371 = vmatpush1.msra.mxu0 0.0
  %1372 = vmatprep.subr.mxu0 0.0
  %1373 = vmatpush1.msra.mxu0 0.0
  %1374 = vmatprep.subr.mxu0 0.0
  %1375 = vmatpush1.msra.mxu0 0.0
  %1376 = vmatprep.subr.mxu0 0.0
  %1377 = vmatpush1.msra.mxu0 0.0
  %1378 = vmatprep.subr.mxu0 0.0
  %1379 = vmatpush1.msra.mxu0 0.0
  %1380 = vmatprep.subr.mxu0 0.0
  %1381 = vmatpush1.msra.mxu0 0.0
  %1382 = vmatprep.subr.mxu0 0.0
  %1383 = vmatpush1.msra.mxu0 0.0
  %1384 = vmatprep.mubr.f32.mxu0 0.0
  %1385 = vmatmul.mubr.f32.gmra.mrb[0].mxu0 %v1082
  %v1386 = vpop.f32.mrb[0].mxu0
  %v1387 = vadd.f32 0.0, %v1386
  %v1388 = vpop.f32.mrb[0].mxu0
  %1389 = vmatprep.mubr.f32.mxu0 0.0
  %1390 = vmatmul.mubr.f32.gmra.mrb[0].mxu0 %v1087
  %v1391 = vpop.f32.mrb[0].mxu0
  %v1392 = vadd.f32 0.0, %v1391
  %v1393 = vpop.f32.mrb[0].mxu0
  %1394 = vmatprep.mubr.f32.mxu0 0.0
  %1395 = vmatmul.mubr.f32.gmra.mrb[0].mxu0 %v1092
  %v1396 = vpop.f32.mrb[0].mxu0
  %v1397 = vadd.f32 0.0, %v1396
  %v1398 = vpop.f32.mrb[0].mxu0
  %1399 = vmatprep.mubr.f32.mxu0 0.0
  %1400 = vmatmul.mubr.f32.gmra.mrb[0].mxu0 %v1097
  %v1401 = vpop.f32.mrb[0].mxu0
  %v1402 = vadd.f32 0.0, %v1401
  %v1403 = vpop.f32.mrb[0].mxu0
  %1404 = vdwg.mxu0
  %v1405 = vadd.f32 %v1285, %v1387
  %v1406 = vadd.f32 %v1290, %v1392
  %v1407 = vadd.f32 %v1295, %v1397
  %v1408 = vadd.f32 %v1300, %v1402
  %v1409 = vld [vmem:[%s7] sm:$0xff]
  %v1410 = vld [vmem:[%s7 + $0x8] sm:$0xff]
  %v1411 = vld [vmem:[%s7 + $0x10] sm:$0xff]
  %v1412 = vld [vmem:[%s7 + $0x18] sm:$0xff]
  %v1413 = vld [vmem:[%s7 + $0x20] sm:$0xff]
  %v1414 = vld [vmem:[%s7 + $0x28] sm:$0xff]
  %v1415 = vld [vmem:[%s7 + $0x30] sm:$0xff]
  %v1416 = vld [vmem:[%s7 + $0x38] sm:$0xff]
  %v1417 = vld [vmem:[%s8] sm:$0xf]
  %v1418 = vld [vmem:[%s11] sm:$0x1]
  %v1419 = vld [vmem:[%s12] sm:$0x1]
  %v1420 = vsel %vm268, %v1405, 0.0
  %v1421 = vsel %vm268, %v1406, 0.0
  %v1422 = vadd.f32 %v1420, %v1421
  %v1423 = vsel %vm268, %v1407, 0.0
  %v1424 = vadd.f32 %v1422, %v1423
  %v1425 = vsel %vm268, %v1408, 0.0
  %v1426 = vadd.f32 %v1424, %v1425
  %v1427 = vrot.slane %v1426, 4
  %v1428 = vadd.f32 %v1426, %v1427
  %v1429 = vrot.slane %v1428, 2
  %v1430 = vadd.f32 %v1428, %v1429
  %v1431 = vrot.slane %v1430, 1
  %v1432 = vadd.f32 %v1430, %v1431
  %v1433 = vmul.f32 %v1405, %v1405
  %v1434 = vmul.f32 %v1406, %v1406
  %v1435 = vmul.f32 %v1407, %v1407
  %v1436 = vmul.f32 %v1408, %v1408
  %v1437 = vsel %vm268, %v1433, 0.0
  %v1438 = vsel %vm268, %v1434, 0.0
  %v1439 = vadd.f32 %v1437, %v1438
  %v1440 = vsel %vm268, %v1435, 0.0
  %v1441 = vadd.f32 %v1439, %v1440
  %v1442 = vsel %vm268, %v1436, 0.0
  %v1443 = vadd.f32 %v1441, %v1442
  %v1444 = vrot.slane %v1443, 4
  %v1445 = vadd.f32 %v1443, %v1444
  %v1446 = vrot.slane %v1445, 2
  %v1447 = vadd.f32 %v1445, %v1446
  %v1448 = vrot.slane %v1447, 1
  %v1449 = vadd.f32 %v1447, %v1448
  %v1451 = vsel %vm268, %v1432, 0
  %1453 = vmatprep.subr.mxu0 0.0
  %1454 = vmatpush1.msra.mxu0 %v1409
  %1455 = vmatprep.subr.mxu0 0.0
  %1456 = vmatpush1.msra.mxu0 %v1410
  %1457 = vmatprep.subr.mxu0 0.0
  %1458 = vmatpush1.msra.mxu0 %v1411
  %1459 = vmatprep.subr.mxu0 0.0
  %1460 = vmatpush1.msra.mxu0 %v1412
  %1461 = vmatprep.subr.mxu0 0.0
  %1462 = vmatpush1.msra.mxu0 %v1413
  %1463 = vmatprep.subr.mxu0 0.0
  %1464 = vmatpush1.msra.mxu0 %v1414
  %1465 = vmatprep.subr.mxu0 0.0
  %1466 = vmatpush1.msra.mxu0 %v1415
  %1467 = vmatprep.subr.mxu0 0.0
  %1468 = vmatpush1.msra.mxu0 %v1416
  %1469 = vmatprep.subr.mxu0 0.0
  %1470 = vmatpush1.msra.mxu0 0.0
  %1471 = vmatprep.subr.mxu0 0.0
  %1472 = vmatpush1.msra.mxu0 0.0
  %1473 = vmatprep.subr.mxu0 0.0
  %1474 = vmatpush1.msra.mxu0 0.0
  %1475 = vmatprep.subr.mxu0 0.0
  %1476 = vmatpush1.msra.mxu0 0.0
  %1477 = vmatprep.subr.mxu0 0.0
  %1478 = vmatpush1.msra.mxu0 0.0
  %1479 = vmatprep.subr.mxu0 0.0
  %1480 = vmatpush1.msra.mxu0 0.0
  %1481 = vmatprep.subr.mxu0 0.0
  %1482 = vmatpush1.msra.mxu0 0.0
  %1483 = vmatprep.subr.mxu0 0.0
  %1484 = vmatpush1.msra.mxu0 0.0
  %1485 = vmatprep.subr.mxu0 0.0
  %1486 = vmatpush1.msra.mxu0 0.0
  %1487 = vmatprep.subr.mxu0 0.0
  %1488 = vmatpush1.msra.mxu0 0.0
  %1489 = vmatprep.subr.mxu0 0.0
  %1490 = vmatpush1.msra.mxu0 0.0
  %1491 = vmatprep.subr.mxu0 0.0
  %1492 = vmatpush1.msra.mxu0 0.0
  %1493 = vmatprep.subr.mxu0 0.0
  %1494 = vmatpush1.msra.mxu0 0.0
  %1495 = vmatprep.subr.mxu0 0.0
  %1496 = vmatpush1.msra.mxu0 0.0
  %1497 = vmatprep.subr.mxu0 0.0
  %1498 = vmatpush1.msra.mxu0 0.0
  %1499 = vmatprep.subr.mxu0 0.0
  %1500 = vmatpush1.msra.mxu0 0.0
  %1501 = vmatprep.subr.mxu0 0.0
  %1502 = vmatpush1.msra.mxu0 0.0
  %1503 = vmatprep.subr.mxu0 0.0
  %1504 = vmatpush1.msra.mxu0 0.0
  %1505 = vmatprep.subr.mxu0 0.0
  %1506 = vmatpush1.msra.mxu0 0.0
  %1507 = vmatprep.subr.mxu0 0.0
  %1508 = vmatpush1.msra.mxu0 0.0
  %1509 = vmatprep.subr.mxu0 0.0
  %1510 = vmatpush1.msra.mxu0 0.0
  %1511 = vmatprep.subr.mxu0 0.0
  %1512 = vmatpush1.msra.mxu0 0.0
  %1513 = vmatprep.subr.mxu0 0.0
  %1514 = vmatpush1.msra.mxu0 0.0
  %1515 = vmatprep.subr.mxu0 0.0
  %1516 = vmatpush1.msra.mxu0 0.0
  %1517 = vmatprep.mubr.f32.mxu0 0.0
  %1518 = vmatmul.mubr.f32.gmra.mrb[0].mxu0 %v1451
  %v1519 = vpop.f32.mrb[0].mxu0
  %v1520 = vadd.f32 0.0, %v1519
  %v1521 = vpop.f32.mrb[0].mxu0
  %1522 = vdwg.mxu0
  %v1523 = vmul.f32 %v1520, 0.001953125
  %v1525 = vsel %vm268, %v1449, 0
  %1527 = vmatprep.subr.mxu0 0.0
  %1528 = vmatpush1.msra.mxu0 %v1409
  %1529 = vmatprep.subr.mxu0 0.0
  %1530 = vmatpush1.msra.mxu0 %v1410
  %1531 = vmatprep.subr.mxu0 0.0
  %1532 = vmatpush1.msra.mxu0 %v1411
  %1533 = vmatprep.subr.mxu0 0.0
  %1534 = vmatpush1.msra.mxu0 %v1412
  %1535 = vmatprep.subr.mxu0 0.0
  %1536 = vmatpush1.msra.mxu0 %v1413
  %1537 = vmatprep.subr.mxu0 0.0
  %1538 = vmatpush1.msra.mxu0 %v1414
  %1539 = vmatprep.subr.mxu0 0.0
  %1540 = vmatpush1.msra.mxu0 %v1415
  %1541 = vmatprep.subr.mxu0 0.0
  %1542 = vmatpush1.msra.mxu0 %v1416
  %1543 = vmatprep.subr.mxu0 0.0
  %1544 = vmatpush1.msra.mxu0 0.0
  %1545 = vmatprep.subr.mxu0 0.0
  %1546 = vmatpush1.msra.mxu0 0.0
  %1547 = vmatprep.subr.mxu0 0.0
  %1548 = vmatpush1.msra.mxu0 0.0
  %1549 = vmatprep.subr.mxu0 0.0
  %1550 = vmatpush1.msra.mxu0 0.0
  %1551 = vmatprep.subr.mxu0 0.0
  %1552 = vmatpush1.msra.mxu0 0.0
  %1553 = vmatprep.subr.mxu0 0.0
  %1554 = vmatpush1.msra.mxu0 0.0
  %1555 = vmatprep.subr.mxu0 0.0
  %1556 = vmatpush1.msra.mxu0 0.0
  %1557 = vmatprep.subr.mxu0 0.0
  %1558 = vmatpush1.msra.mxu0 0.0
  %1559 = vmatprep.subr.mxu0 0.0
  %1560 = vmatpush1.msra.mxu0 0.0
  %1561 = vmatprep.subr.mxu0 0.0
  %1562 = vmatpush1.msra.mxu0 0.0
  %1563 = vmatprep.subr.mxu0 0.0
  %1564 = vmatpush1.msra.mxu0 0.0
  %1565 = vmatprep.subr.mxu0 0.0
  %1566 = vmatpush1.msra.mxu0 0.0
  %1567 = vmatprep.subr.mxu0 0.0
  %1568 = vmatpush1.msra.mxu0 0.0
  %1569 = vmatprep.subr.mxu0 0.0
  %1570 = vmatpush1.msra.mxu0 0.0
  %1571 = vmatprep.subr.mxu0 0.0
  %1572 = vmatpush1.msra.mxu0 0.0
  %1573 = vmatprep.subr.mxu0 0.0
  %1574 = vmatpush1.msra.mxu0 0.0
  %1575 = vmatprep.subr.mxu0 0.0
  %1576 = vmatpush1.msra.mxu0 0.0
  %1577 = vmatprep.subr.mxu0 0.0
  %1578 = vmatpush1.msra.mxu0 0.0
  %1579 = vmatprep.subr.mxu0 0.0
  %1580 = vmatpush1.msra.mxu0 0.0
  %1581 = vmatprep.subr.mxu0 0.0
  %1582 = vmatpush1.msra.mxu0 0.0
  %1583 = vmatprep.subr.mxu0 0.0
  %1584 = vmatpush1.msra.mxu0 0.0
  %1585 = vmatprep.subr.mxu0 0.0
  %1586 = vmatpush1.msra.mxu0 0.0
  %1587 = vmatprep.subr.mxu0 0.0
  %1588 = vmatpush1.msra.mxu0 0.0
  %1589 = vmatprep.subr.mxu0 0.0
  %1590 = vmatpush1.msra.mxu0 0.0
  %1591 = vmatprep.mubr.f32.mxu0 0.0
  %1592 = vmatmul.mubr.f32.gmra.mrb[0].mxu0 %v1525
  %v1593 = vpop.f32.mrb[0].mxu0
  %v1594 = vadd.f32 0.0, %v1593
  %v1595 = vpop.f32.mrb[0].mxu0
  %1596 = vdwg.mxu0
  %v1597 = vmul.f32 %v1594, 0.001953125
  %v1598 = vmul.f32 %v1523, %v1523
  %v1599 = vsub.f32 %v1597, %v1598
  %v1600 = vadd.f32 %v1599, 1e-05
  %v1601 = vrsqrt.pop %v1600
  %v1602 = vmul.f32 %v1418, %v1601
  %v1603 = vmul.f32 %v1523, %v1602
  %v1604 = vsub.f32 %v1419, %v1603
  %vm1605 = vcmask 31744
  %v1607 = vsel %vm1605, %v1602, 0
  %vm1609 = vcmask 1043456
  %v1611 = vsel %vm1609, %v1417, 0
  %1613 = vmatprep.subr.mxu0 0.0
  %1614 = vmatpush1.msra.mxu0 %v1611
  %1615 = vmatprep.subr.mxu0 0.0
  %1616 = vmatpush1.msra.mxu0 0.0
  %1617 = vmatprep.subr.mxu0 0.0
  %1618 = vmatpush1.msra.mxu0 0.0
  %1619 = vmatprep.subr.mxu0 0.0
  %1620 = vmatpush1.msra.mxu0 0.0
  %1621 = vmatprep.subr.mxu0 0.0
  %1622 = vmatpush1.msra.mxu0 0.0
  %1623 = vmatprep.subr.mxu0 0.0
  %1624 = vmatpush1.msra.mxu0 0.0
  %1625 = vmatprep.subr.mxu0 0.0
  %1626 = vmatpush1.msra.mxu0 0.0
  %1627 = vmatprep.subr.mxu0 0.0
  %1628 = vmatpush1.msra.mxu0 0.0
  %1629 = vmatprep.subr.mxu0 0.0
  %1630 = vmatpush1.msra.mxu0 0.0
  %1631 = vmatprep.subr.mxu0 0.0
  %1632 = vmatpush1.msra.mxu0 0.0
  %1633 = vmatprep.subr.mxu0 0.0
  %1634 = vmatpush1.msra.mxu0 0.0
  %1635 = vmatprep.subr.mxu0 0.0
  %1636 = vmatpush1.msra.mxu0 0.0
  %1637 = vmatprep.subr.mxu0 0.0
  %1638 = vmatpush1.msra.mxu0 0.0
  %1639 = vmatprep.subr.mxu0 0.0
  %1640 = vmatpush1.msra.mxu0 0.0
  %1641 = vmatprep.subr.mxu0 0.0
  %1642 = vmatpush1.msra.mxu0 0.0
  %1643 = vmatprep.subr.mxu0 0.0
  %1644 = vmatpush1.msra.mxu0 0.0
  %1645 = vmatprep.subr.mxu0 0.0
  %1646 = vmatpush1.msra.mxu0 0.0
  %1647 = vmatprep.subr.mxu0 0.0
  %1648 = vmatpush1.msra.mxu0 0.0
  %1649 = vmatprep.subr.mxu0 0.0
  %1650 = vmatpush1.msra.mxu0 0.0
  %1651 = vmatprep.subr.mxu0 0.0
  %1652 = vmatpush1.msra.mxu0 0.0
  %1653 = vmatprep.subr.mxu0 0.0
  %1654 = vmatpush1.msra.mxu0 0.0
  %1655 = vmatprep.subr.mxu0 0.0
  %1656 = vmatpush1.msra.mxu0 0.0
  %1657 = vmatprep.subr.mxu0 0.0
  %1658 = vmatpush1.msra.mxu0 0.0
  %1659 = vmatprep.subr.mxu0 0.0
  %1660 = vmatpush1.msra.mxu0 0.0
  %1661 = vmatprep.subr.mxu0 0.0
  %1662 = vmatpush1.msra.mxu0 0.0
  %1663 = vmatprep.subr.mxu0 0.0
  %1664 = vmatpush1.msra.mxu0 0.0
  %1665 = vmatprep.subr.mxu0 0.0
  %1666 = vmatpush1.msra.mxu0 0.0
  %1667 = vmatprep.subr.mxu0 0.0
  %1668 = vmatpush1.msra.mxu0 0.0
  %1669 = vmatprep.subr.mxu0 0.0
  %1670 = vmatpush1.msra.mxu0 0.0
  %1671 = vmatprep.subr.mxu0 0.0
  %1672 = vmatpush1.msra.mxu0 0.0
  %1673 = vmatprep.subr.mxu0 0.0
  %1674 = vmatpush1.msra.mxu0 0.0
  %1675 = vmatprep.subr.mxu0 0.0
  %1676 = vmatpush1.msra.mxu0 0.0
  %1677 = vmatprep.mubr.f32.mxu0 0.0
  %1678 = vmatmul.mubr.f32.gmra.mrb[0].mxu0 %v1607
  %v1679 = vpop.f32.mrb[0].mxu0
  %v1680 = vadd.f32 0.0, %v1679
  %v1681 = vpop.f32.mrb[0].mxu0
  %1682 = vdwg.mxu0
  %v1684 = vsel %vm1605, %v1604, 0
  %1686 = vmatprep.subr.mxu0 0.0
  %1687 = vmatpush1.msra.mxu0 %v1611
  %1688 = vmatprep.subr.mxu0 0.0
  %1689 = vmatpush1.msra.mxu0 0.0
  %1690 = vmatprep.subr.mxu0 0.0
  %1691 = vmatpush1.msra.mxu0 0.0
  %1692 = vmatprep.subr.mxu0 0.0
  %1693 = vmatpush1.msra.mxu0 0.0
  %1694 = vmatprep.subr.mxu0 0.0
  %1695 = vmatpush1.msra.mxu0 0.0
  %1696 = vmatprep.subr.mxu0 0.0
  %1697 = vmatpush1.msra.mxu0 0.0
  %1698 = vmatprep.subr.mxu0 0.0
  %1699 = vmatpush1.msra.mxu0 0.0
  %1700 = vmatprep.subr.mxu0 0.0
  %1701 = vmatpush1.msra.mxu0 0.0
  %1702 = vmatprep.subr.mxu0 0.0
  %1703 = vmatpush1.msra.mxu0 0.0
  %1704 = vmatprep.subr.mxu0 0.0
  %1705 = vmatpush1.msra.mxu0 0.0
  %1706 = vmatprep.subr.mxu0 0.0
  %1707 = vmatpush1.msra.mxu0 0.0
  %1708 = vmatprep.subr.mxu0 0.0
  %1709 = vmatpush1.msra.mxu0 0.0
  %1710 = vmatprep.subr.mxu0 0.0
  %1711 = vmatpush1.msra.mxu0 0.0
  %1712 = vmatprep.subr.mxu0 0.0
  %1713 = vmatpush1.msra.mxu0 0.0
  %1714 = vmatprep.subr.mxu0 0.0
  %1715 = vmatpush1.msra.mxu0 0.0
  %1716 = vmatprep.subr.mxu0 0.0
  %1717 = vmatpush1.msra.mxu0 0.0
  %1718 = vmatprep.subr.mxu0 0.0
  %1719 = vmatpush1.msra.mxu0 0.0
  %1720 = vmatprep.subr.mxu0 0.0
  %1721 = vmatpush1.msra.mxu0 0.0
  %1722 = vmatprep.subr.mxu0 0.0
  %1723 = vmatpush1.msra.mxu0 0.0
  %1724 = vmatprep.subr.mxu0 0.0
  %1725 = vmatpush1.msra.mxu0 0.0
  %1726 = vmatprep.subr.mxu0 0.0
  %1727 = vmatpush1.msra.mxu0 0.0
  %1728 = vmatprep.subr.mxu0 0.0
  %1729 = vmatpush1.msra.mxu0 0.0
  %1730 = vmatprep.subr.mxu0 0.0
  %1731 = vmatpush1.msra.mxu0 0.0
  %1732 = vmatprep.subr.mxu0 0.0
  %1733 = vmatpush1.msra.mxu0 0.0
  %1734 = vmatprep.subr.mxu0 0.0
  %1735 = vmatpush1.msra.mxu0 0.0
  %1736 = vmatprep.subr.mxu0 0.0
  %1737 = vmatpush1.msra.mxu0 0.0
  %1738 = vmatprep.subr.mxu0 0.0
  %1739 = vmatpush1.msra.mxu0 0.0
  %1740 = vmatprep.subr.mxu0 0.0
  %1741 = vmatpush1.msra.mxu0 0.0
  %1742 = vmatprep.subr.mxu0 0.0
  %1743 = vmatpush1.msra.mxu0 0.0
  %1744 = vmatprep.subr.mxu0 0.0
  %1745 = vmatpush1.msra.mxu0 0.0
  %1746 = vmatprep.subr.mxu0 0.0
  %1747 = vmatpush1.msra.mxu0 0.0
  %1748 = vmatprep.subr.mxu0 0.0
  %1749 = vmatpush1.msra.mxu0 0.0
  %1750 = vmatprep.mubr.f32.mxu0 0.0
  %1751 = vmatmul.mubr.f32.gmra.mrb[0].mxu0 %v1684
  %v1752 = vpop.f32.mrb[0].mxu0
  %v1753 = vadd.f32 0.0, %v1752
  %v1754 = vpop.f32.mrb[0].mxu0
  %1755 = vdwg.mxu0
  %v1756 = vlaneseq
  %v1757 = vshrl.u32 %v1756, 7
  %v1758 = vsub.s32 0, %v1757
  %v1759 = vrot.slane %v1680, %v1758
  %v1760 = vmul.f32 %v1405, %v1759
  %v1761 = vmul.f32 %v1406, %v1759
  %v1762 = vmul.f32 %v1407, %v1759
  %v1763 = vmul.f32 %v1408, %v1759
  %v1764 = vlaneseq
  %v1765 = vshrl.u32 %v1764, 7
  %v1766 = vsub.s32 0, %v1765
  %v1767 = vrot.slane %v1753, %v1766
  %v1768 = vadd.f32 %v1760, %v1767
  %v1769 = vadd.f32 %v1761, %v1767
  %v1770 = vadd.f32 %v1762, %v1767
  %v1771 = vadd.f32 %v1763, %v1767
  %v1772 = vmax.f32 %v1768, 0.0
  %v1773 = vmax.f32 %v1769, 0.0
  %v1774 = vmax.f32 %v1770, 0.0
  %v1775 = vmax.f32 %v1771, 0.0
  %v1776 = vadd.f32 %v44, %v1772
  %v1777 = vadd.f32 %v45, %v1773
  %v1778 = vadd.f32 %v46, %v1774
  %v1779 = vadd.f32 %v47, %v1775
  %1780 = vst.msk [vmem:[%s13] sm:$0xff] %vm268, %v1776
  %1781 = vst.msk [vmem:[%s13 + $0x8] sm:$0xff] %vm268, %v1777
  %1782 = vst.msk [vmem:[%s13 + $0x10] sm:$0xff] %vm268, %v1778
  %1783 = vst.msk [vmem:[%s13 + $0x18] sm:$0xff] %vm268, %v1779
  // Predicated region
  $region54: #{resblock_forward.1} parent=0 // pred_check
    _
  $region55: #{resblock_forward.1} parent=0 // pred_check_branch
    %1785 = sbr.rel (0) target = $region57
  $region56: #{resblock_forward.1} parent=0 // pred_region
    _
  $region57: #{resblock_forward.1} parent=0 // pred_fallthru
    _
  // Predicated region
  $region58: #{resblock_forward.1} parent=0 // pred_check
    _
  $region59: #{resblock_forward.1} parent=0 // pred_check_branch
    %1787 = sbr.rel (0) target = $region61
  $region60: #{resblock_forward.1} parent=0 // pred_region
    _
  $region61: #{resblock_forward.1} parent=0 // pred_fallthru
    _

</llo_original>
